<compile_context>
chip_gen: v7x
topology: tpu7x:2x2x1
jax: 0.10.0
libtpu: 0.0.40
codegen_flags: <defaults>
</compile_context>

<pallas_src>
import functools

import jax
import jax.numpy as jnp
import numpy as np
from jax import lax
from jax.experimental import pallas as pl
from jax.experimental.pallas import tpu as pltpu


@functools.lru_cache(maxsize=1)
def _vmem_limit_bytes():
    """~75% of physical VMEM (96 MiB v5e/v6e, 48 MiB v7x), conservative fallback."""
    try:
        cap = int(pltpu.get_tpu_info().vmem_capacity_bytes)
    except Exception:
        cap = 64 * 1024 * 1024
    return min(cap * 3 // 4, 100 * 1024 * 1024)


# ----------------------------------------------------------------------------
# Fused bidirectional LSTM layer kernel
# ----------------------------------------------------------------------------
def _make_bilstm_layer_kernel(T, B, H, is_last):
    """One bidirectional LSTM layer (both directions, whole sequence) per launch.

    is_last: skip per-timestep outputs and fuse the Linear+tanh epilogue.
    Gate column layout of W_ih/W_hh/b is (i, f, o, g) (pre-permuted outside).
    """

    def kernel(*refs):
        it = iter(refs)
        maxlen_ref = next(it)                       # SMEM (1,)  int32
        len_ref = next(it)                          # VMEM (B,1) int32
        x_ref = next(it)                            # VMEM (T*B, D_in)
        wih_f_ref = next(it); whh_f_ref = next(it); b_f_ref = next(it)
        wih_b_ref = next(it); whh_b_ref = next(it); b_b_ref = next(it)
        if is_last:
            wlin_ref = next(it); blin_ref = next(it)
            o_ref = next(it)                        # (B, H_out)
        else:
            out_ref = next(it)                      # (T, B, 2H) packed fwd|bwd
        gxf_sc = next(it)                           # (T*B, 4H) precomputed fwd x-gates
        gxb_sc = next(it)                           # (T*B, 4H) precomputed bwd x-gates

        # ---- hoisted input projection: one big MXU matmul per direction ----
        x = x_ref[...]
        gxf_sc[...] = jnp.dot(x, wih_f_ref[...],
                              preferred_element_type=jnp.float32) + b_f_ref[...]
        gxb_sc[...] = jnp.dot(x, wih_b_ref[...],
                              preferred_element_type=jnp.float32) + b_b_ref[...]

        lengths = len_ref[...]                      # (B, 1) int32
        max_len = maxlen_ref[0]

        def cell(gates, c_prev):
            # Gate order (i, f, o, g): one contiguous sigmoid slab + tanh on g only.
            sig = jax.nn.sigmoid(gates[:, 0:3 * H])
            i_g = sig[:, 0:H]
            f_g = sig[:, H:2 * H]
            o_g = sig[:, 2 * H:3 * H]
            g_g = jnp.tanh(gates[:, 3 * H:4 * H])
            c_new = f_g * c_prev + i_g * g_g
            h_new = o_g * jnp.tanh(c_new)
            return h_new, c_new

        def step(s, carry):
            h_f, c_f, h_b, c_b = carry              # register-carried state

            # ---- forward direction at t = s ----
            tf = s
            rowf = pl.multiple_of(tf * B, B)
            gates_f = gxf_sc[pl.ds(rowf, B), :] + jnp.dot(
                h_f, whh_f_ref[...], preferred_element_type=jnp.float32)
            hf_new, cf_new = cell(gates_f, c_f)
            valid_f = tf < lengths
            h_f = jnp.where(valid_f, hf_new, h_f)
            c_f = jnp.where(valid_f, cf_new, c_f)

            # ---- backward direction at t = max_len - 1 - s ----
            tb = max_len - 1 - s
            rowb = pl.multiple_of(tb * B, B)
            gates_b = gxb_sc[pl.ds(rowb, B), :] + jnp.dot(
                h_b, whh_b_ref[...], preferred_element_type=jnp.float32)
            hb_new, cb_new = cell(gates_b, c_b)
            valid_b = tb < lengths
            h_b = jnp.where(valid_b, hb_new, h_b)
            c_b = jnp.where(valid_b, cb_new, c_b)

            if not is_last:
                # Packed lane-dense output: fwd -> [:H], bwd -> [H:2H].
                out_ref[tf, :, 0:H] = jnp.where(valid_f, hf_new, 0.0)
                out_ref[tb, :, H:2 * H] = jnp.where(valid_b, hb_new, 0.0)
            return (h_f, c_f, h_b, c_b)

        z = jnp.zeros((B, H), jnp.float32)
        h_f, _, h_b, _ = lax.fori_loop(0, max_len, step, (z, z, z, z))

        if is_last:
            # Fused epilogue: tanh(concat(h_f, h_b) @ W_lin + b_lin) as a split matmul.
            o_ref[...] = jnp.tanh(
                jnp.dot(h_f, wlin_ref[0:H, :], preferred_element_type=jnp.float32)
                + jnp.dot(h_b, wlin_ref[H:2 * H, :], preferred_element_type=jnp.float32)
                + blin_ref[...])
        else:
            # Zero ONLY the fully-padded tail t in [max_len, T); valid-range padding
            # was already zeroed by the masked per-step writes.
            def zero_tail(t, c):
                out_ref[t] = jnp.zeros((B, 2 * H), jnp.float32)
                return c
            lax.fori_loop(max_len, T, zero_tail, 0)

    return kernel


def _bilstm_layer(x_flat, layer, lengths_col, max_len, T, B, *,
                  is_last, w_lin_t=None, b_lin=None):
    H = layer["w_hh_f"].shape[0]
    kernel = _make_bilstm_layer_kernel(T, B, H, is_last)

    inputs = [max_len, lengths_col, x_flat,
              layer["w_ih_f"], layer["w_hh_f"], layer["b_f"],
              layer["w_ih_b"], layer["w_hh_b"], layer["b_b"]]
    if is_last:
        inputs += [w_lin_t, b_lin]

    in_specs = ([pl.BlockSpec(memory_space=pltpu.MemorySpace.SMEM)]
                + [pl.BlockSpec(memory_space=pltpu.MemorySpace.VMEM)] * (len(inputs) - 1))

    if is_last:
        h_out = w_lin_t.shape[1]
        out_shape = jax.ShapeDtypeStruct((B, h_out), jnp.float32)
    else:
        out_shape = jax.ShapeDtypeStruct((T, B, 2 * H), jnp.float32)
    out_specs = pl.BlockSpec(memory_space=pltpu.MemorySpace.VMEM)

    scratch_shapes = [
        pltpu.VMEM((T * B, 4 * H), jnp.float32),    # precomputed fwd input gates
        pltpu.VMEM((T * B, 4 * H), jnp.float32),    # precomputed bwd input gates
    ]

    return pl.pallas_call(
        kernel,
        out_shape=out_shape,
        in_specs=in_specs,
        out_specs=out_specs,
        scratch_shapes=scratch_shapes,
        compiler_params=pltpu.CompilerParams(
            vmem_limit_bytes=_vmem_limit_bytes()),
    )(*inputs)


# ----------------------------------------------------------------------------
# Forward pass (glue in plain JAX, hot path in Pallas)
# ----------------------------------------------------------------------------
def sequence_encoder_forward(kparams, src_tokens, lengths):
    """src_tokens: (T, B) int32, lengths: (B,) int32  ->  (B, h_dim) float32.

    kparams must be produced by prepare_kernel_params (gate columns permuted to
    (i, f, o, g)).
    """
    T, B0 = src_tokens.shape
    B = ((B0 + 7) // 8) * 8                          # pad batch to 8 sublanes
    pad_b = B - B0

    x = jnp.take(kparams["emb"], src_tokens, axis=0)  # (T, B0, in_dim) glue gather
    lengths = jnp.minimum(lengths.astype(jnp.int32), T)   # guard: no OOB past T
    if pad_b:
        x = jnp.pad(x, ((0, 0), (0, pad_b), (0, 0)))
        lengths = jnp.pad(lengths, (0, pad_b))       # padded rows: length 0 (inert)
    lengths_col = lengths.reshape(B, 1)
    max_len = jnp.max(lengths).astype(jnp.int32).reshape(1)   # SMEM loop bound

    num_layers = len(kparams["lstm"])
    x_flat = x.reshape(T * B, -1)
    out = None
    for li, layer in enumerate(kparams["lstm"]):
        is_last = li == num_layers - 1
        res = _bilstm_layer(
            x_flat, layer, lengths_col, max_len, T, B,
            is_last=is_last,
            w_lin_t=kparams["w_lin_t"] if is_last else None,
            b_lin=kparams["b_lin"] if is_last else None)
        if is_last:
            out = res
        else:
            H = layer["w_hh_f"].shape[0]
            # Packed (fwd|bwd) buffer -> pure reshape, no concat / HBM copy.
            x_flat = res.reshape(T * B, 2 * H)
    return out[:B0]                                  # dropout = identity (eval mode)


# ----------------------------------------------------------------------------
# Parameter prep: permute gate columns (i,f,g,o) -> (i,f,o,g) once, up front
# ----------------------------------------------------------------------------
def _permute_gate_cols(w):
    H = w.shape[-1] // 4
    return jnp.concatenate([w[..., :2 * H], w[..., 3 * H:], w[..., 2 * H:3 * H]],
                           axis=-1)


def prepare_kernel_params(params):
    lstm = []
    for layer in params["lstm"]:
        lstm.append({k: _permute_gate_cols(v) for k, v in layer.items()})
    return {"emb": params["emb"], "lstm": lstm,
            "w_lin_t": params["w_lin_t"], "b_lin": params["b_lin"]}


# ----------------------------------------------------------------------------
# Pure-JAX reference (PyTorch gate order) for correctness check
# ----------------------------------------------------------------------------
def _ref_lstm_dir(x, wih_t, whh_t, b, lengths, reverse):
    T, B, _ = x.shape
    H = whh_t.shape[0]
    h = jnp.zeros((B, H), jnp.float32)
    c = jnp.zeros((B, H), jnp.float32)
    outs = [None] * T
    ts = range(T - 1, -1, -1) if reverse else range(T)
    len_col = lengths.reshape(-1, 1)
    for t in ts:
        gates = x[t] @ wih_t + h @ whh_t + b
        i_g = jax.nn.sigmoid(gates[:, :H])
        f_g = jax.nn.sigmoid(gates[:, H:2 * H])
        g_g = jnp.tanh(gates[:, 2 * H:3 * H])
        o_g = jax.nn.sigmoid(gates[:, 3 * H:])
        c_new = f_g * c + i_g * g_g
        h_new = o_g * jnp.tanh(c_new)
        valid = t < len_col
        c = jnp.where(valid, c_new, c)
        h = jnp.where(valid, h_new, h)
        outs[t] = jnp.where(valid, h_new, 0.0)
    return jnp.stack(outs, 0), h


def _ref_forward(params, src_tokens, lengths):
    x = jnp.take(params["emb"], src_tokens, axis=0)
    layer_in = x
    h_f = h_b = None
    for layer in params["lstm"]:
        out_f, h_f = _ref_lstm_dir(layer_in, layer["w_ih_f"], layer["w_hh_f"],
                                   layer["b_f"], lengths, reverse=False)
        out_b, h_b = _ref_lstm_dir(layer_in, layer["w_ih_b"], layer["w_hh_b"],
                                   layer["b_b"], lengths, reverse=True)
        layer_in = jnp.concatenate([out_f, out_b], axis=-1)
    out_cat = jnp.concatenate([h_f, h_b], axis=1)
    return jnp.tanh(out_cat @ params["w_lin_t"] + params["b_lin"])


# ----------------------------------------------------------------------------
# Deterministic parameter construction (PyTorch shapes, pre-transposed, i/f/g/o)
# ----------------------------------------------------------------------------
def init_params(key, vocab_size, in_dim, h_dim, num_layers, padding_idx):
    keys = jax.random.split(key, 2 + num_layers)
    emb = jax.random.normal(keys[0], (vocab_size, in_dim), jnp.float32)
    emb = emb.at[padding_idx].set(0.0)               # nn.Embedding padding_idx

    k = 1.0 / np.sqrt(h_dim)
    lstm_layers = []
    for l in range(num_layers):
        d_in = in_dim if l == 0 else 2 * h_dim
        sub = jax.random.split(keys[2 + l], 8)

        def u(kk, shape):
            return jax.random.uniform(kk, shape, jnp.float32, -k, k)

        layer = {
            # stored transposed relative to PyTorch (4H, D) layout
            "w_ih_f": u(sub[0], (d_in, 4 * h_dim)),
            "w_hh_f": u(sub[1], (h_dim, 4 * h_dim)),
            "b_f": (u(sub[2], (1, 4 * h_dim)) + u(sub[3], (1, 4 * h_dim))),  # b_ih+b_hh
            "w_ih_b": u(sub[4], (d_in, 4 * h_dim)),
            "w_hh_b": u(sub[5], (h_dim, 4 * h_dim)),
            "b_b": (u(sub[6], (1, 4 * h_dim)) + u(sub[7], (1, 4 * h_dim))),
        }
        lstm_layers.append(layer)

    klin = 1.0 / np.sqrt(2 * h_dim)
    lk1, lk2 = jax.random.split(keys[1])
    w_lin_t = jax.random.uniform(lk1, (2 * h_dim, h_dim), jnp.float32, -klin, klin)
    b_lin = jax.random.uniform(lk2, (1, h_dim), jnp.float32, -klin, klin)

    return {"emb": emb, "lstm": lstm_layers, "w_lin_t": w_lin_t, "b_lin": b_lin}


# ----------------------------------------------------------------------------
if __name__ == "__main__":
    vocab_size = 50
    in_dim = 32
    h_dim = 128        # multiple of 128 -> lane-aligned packed (fwd|bwd) writes
    num_layers = 2
    padding_idx = 0
    T, B = 10, 4

    key = jax.random.PRNGKey(0)
    kp, kt = jax.random.split(key, 2)

    params = init_params(kp, vocab_size, in_dim, h_dim, num_layers, padding_idx)
    kparams = prepare_kernel_params(params)          # one-time gate permutation

    # max length 9 < T exercises both the max_len-bounded loop and the tail zero
    lengths = jnp.array([9, 5, 3, 7], dtype=jnp.int32)
    src = jax.random.randint(kt, (T, B), 1, vocab_size, dtype=jnp.int32)
    t_idx = jnp.arange(T)[:, None]
    src = jnp.where(t_idx < lengths[None, :], src, padding_idx).astype(jnp.int32)

    out = jax.block_until_ready(sequence_encoder_forward(kparams, src, lengths))
    ref = jax.block_until_ready(_ref_forward(params, src, lengths))

    assert out.shape == (B, h_dim)
    if not np.allclose(np.asarray(out), np.asarray(ref), atol=2e-3, rtol=2e-3):
        raise AssertionError("Pallas kernel output does not match reference")

    print("KERNEL_OK")
</pallas_src>

<mosaic_0001>
module attributes {stable_mosaic.version = 11 : i64} {
  func.func @kernel(%arg0: memref<1xi32, #tpu.memory_space<smem>>, %arg1: memref<8x1xi32, #tpu.memory_space<vmem>>, %arg2: memref<80x32xf32, #tpu.memory_space<vmem>>, %arg3: memref<32x512xf32, #tpu.memory_space<vmem>>, %arg4: memref<128x512xf32, #tpu.memory_space<vmem>>, %arg5: memref<1x512xf32, #tpu.memory_space<vmem>>, %arg6: memref<32x512xf32, #tpu.memory_space<vmem>>, %arg7: memref<128x512xf32, #tpu.memory_space<vmem>>, %arg8: memref<1x512xf32, #tpu.memory_space<vmem>>, %arg9: memref<10x8x256xf32, #tpu.memory_space<vmem>>, %arg10: memref<80x512xf32, #tpu.memory_space<vmem>>, %arg11: memref<80x512xf32, #tpu.memory_space<vmem>>) attributes {dimension_semantics = [], scalar_prefetch = 0 : i64, scratch_operands = 2 : i64, tpu.core_type = #tpu.core_type<tc>} {
    %c0 = arith.constant 0 : index
    %c0_0 = arith.constant 0 : index
    %0 = vector.load %arg2[%c0, %c0_0] : memref<80x32xf32, #tpu.memory_space<vmem>>, vector<80x32xf32>
    %c0_1 = arith.constant 0 : index
    %c0_2 = arith.constant 0 : index
    %1 = vector.load %arg3[%c0_1, %c0_2] : memref<32x512xf32, #tpu.memory_space<vmem>>, vector<32x512xf32>
    %cst = arith.constant dense<0.000000e+00> : vector<80x512xf32>
    %2 = tpu.matmul %0, %1, %cst {dimension_numbers = #tpu.dot_dimension_numbers<[1], [0], [0], [1], [0, 0, 1, 1], [], []>} : vector<80x32xf32>, vector<32x512xf32>, vector<80x512xf32> -> vector<80x512xf32>
    %c0_3 = arith.constant 0 : index
    %c0_4 = arith.constant 0 : index
    %3 = vector.load %arg5[%c0_3, %c0_4] : memref<1x512xf32, #tpu.memory_space<vmem>>, vector<1x512xf32>
    %4 = vector.broadcast %3 : vector<1x512xf32> to vector<80x512xf32>
    %5 = arith.addf %2, %4 : vector<80x512xf32>
    %c0_5 = arith.constant 0 : index
    %c0_6 = arith.constant 0 : index
    %6 = vector.load %arg10[%c0_5, %c0_6] : memref<80x512xf32, #tpu.memory_space<vmem>>, vector<80x512xf32>
    tpu.vector_store %arg10[%c0_5, %c0_6], %5 {strides = array<i32>} : memref<80x512xf32, #tpu.memory_space<vmem>>, vector<80x512xf32>,
    %c0_7 = arith.constant 0 : index
    %c0_8 = arith.constant 0 : index
    %7 = vector.load %arg6[%c0_7, %c0_8] : memref<32x512xf32, #tpu.memory_space<vmem>>, vector<32x512xf32>
    %cst_9 = arith.constant dense<0.000000e+00> : vector<80x512xf32>
    %8 = tpu.matmul %0, %7, %cst_9 {dimension_numbers = #tpu.dot_dimension_numbers<[1], [0], [0], [1], [0, 0, 1, 1], [], []>} : vector<80x32xf32>, vector<32x512xf32>, vector<80x512xf32> -> vector<80x512xf32>
    %c0_10 = arith.constant 0 : index
    %c0_11 = arith.constant 0 : index
    %9 = vector.load %arg8[%c0_10, %c0_11] : memref<1x512xf32, #tpu.memory_space<vmem>>, vector<1x512xf32>
    %10 = vector.broadcast %9 : vector<1x512xf32> to vector<80x512xf32>
    %11 = arith.addf %8, %10 : vector<80x512xf32>
    %c0_12 = arith.constant 0 : index
    %c0_13 = arith.constant 0 : index
    %12 = vector.load %arg11[%c0_12, %c0_13] : memref<80x512xf32, #tpu.memory_space<vmem>>, vector<80x512xf32>
    tpu.vector_store %arg11[%c0_12, %c0_13], %11 {strides = array<i32>} : memref<80x512xf32, #tpu.memory_space<vmem>>, vector<80x512xf32>,
    %c0_14 = arith.constant 0 : index
    %c0_15 = arith.constant 0 : index
    %13 = vector.load %arg1[%c0_14, %c0_15] : memref<8x1xi32, #tpu.memory_space<vmem>>, vector<8x1xi32>
    %c0_16 = arith.constant 0 : index
    %14 = memref.load %arg0[%c0_16] : memref<1xi32, #tpu.memory_space<smem>>
    %cst_17 = arith.constant 0.000000e+00 : f32
    %15 = vector.broadcast %cst_17 : f32 to vector<8x128xf32>
    %c0_i32 = arith.constant 0 : i32
    %16 = arith.subi %14, %c0_i32 : i32
    %17 = arith.addi %c0_i32, %16 : i32
    %c1_i32 = arith.constant 1 : i32
    %18:4 = scf.for %arg12 = %c0_i32 to %17 step %c1_i32 iter_args(%arg13 = %15, %arg14 = %15, %arg15 = %15, %arg16 = %15) -> (vector<8x128xf32>, vector<8x128xf32>, vector<8x128xf32>, vector<8x128xf32>)  : i32 {
      %c8_i32 = arith.constant 8 : i32
      %21 = arith.muli %arg12, %c8_i32 : i32
      %22 = tpu.assume_multiple %21, 8 : i32
      %23 = arith.index_cast %22 : i32 to index
      %c0_20 = arith.constant 0 : index
      %24 = vector.load %arg10[%23, %c0_20] : memref<80x512xf32, #tpu.memory_space<vmem>>, vector<8x512xf32>
      %c0_21 = arith.constant 0 : index
      %c0_22 = arith.constant 0 : index
      %25 = vector.load %arg4[%c0_21, %c0_22] : memref<128x512xf32, #tpu.memory_space<vmem>>, vector<128x512xf32>
      %cst_23 = arith.constant dense<0.000000e+00> : vector<8x512xf32>
      %26 = tpu.matmul %arg13, %25, %cst_23 {dimension_numbers = #tpu.dot_dimension_numbers<[1], [0], [0], [1], [0, 0, 1, 1], [], []>} : vector<8x128xf32>, vector<128x512xf32>, vector<8x512xf32> -> vector<8x512xf32>
      %27 = arith.addf %24, %26 : vector<8x512xf32>
      %28 = vector.extract_strided_slice %27 {offsets = [0, 0], sizes = [8, 384], strides = [1, 1]} : vector<8x512xf32> to vector<8x384xf32>
      %29 = arith.negf %28 : vector<8x384xf32>
      %30 = math.exp %29 : vector<8x384xf32>
      %cst_24 = arith.constant 1.000000e+00 : f32
      %31 = vector.broadcast %cst_24 : f32 to vector<8x384xf32>
      %32 = arith.addf %31, %30 : vector<8x384xf32>
      %33 = arith.divf %31, %32 : vector<8x384xf32>
      %34 = vector.extract_strided_slice %33 {offsets = [0, 0], sizes = [8, 128], strides = [1, 1]} : vector<8x384xf32> to vector<8x128xf32>
      %35 = vector.extract_strided_slice %33 {offsets = [0, 128], sizes = [8, 128], strides = [1, 1]} : vector<8x384xf32> to vector<8x128xf32>
      %36 = vector.extract_strided_slice %33 {offsets = [0, 256], sizes = [8, 128], strides = [1, 1]} : vector<8x384xf32> to vector<8x128xf32>
      %37 = vector.extract_strided_slice %27 {offsets = [0, 384], sizes = [8, 128], strides = [1, 1]} : vector<8x512xf32> to vector<8x128xf32>
      %38 = math.tanh %37 : vector<8x128xf32>
      %39 = arith.mulf %35, %arg14 : vector<8x128xf32>
      %40 = arith.mulf %34, %38 : vector<8x128xf32>
      %41 = arith.addf %39, %40 : vector<8x128xf32>
      %42 = math.tanh %41 : vector<8x128xf32>
      %43 = arith.mulf %36, %42 : vector<8x128xf32>
      %44 = vector.broadcast %arg12 : i32 to vector<8x1xi32>
      %45 = arith.cmpi slt, %44, %13 : vector<8x1xi32>
      %46 = vector.shape_cast %45 : vector<8x1xi1> to vector<8x1xi1>
      %47 = vector.broadcast %46 : vector<8x1xi1> to vector<8x128xi1>
      %48 = arith.select %47, %43, %arg13 : vector<8x128xi1>, vector<8x128xf32>
      %49 = vector.shape_cast %45 : vector<8x1xi1> to vector<8x1xi1>
      %50 = vector.broadcast %49 : vector<8x1xi1> to vector<8x128xi1>
      %51 = arith.select %50, %41, %arg14 : vector<8x128xi1>, vector<8x128xf32>
      %c1_i32_25 = arith.constant 1 : i32
      %52 = arith.subi %14, %c1_i32_25 : i32
      %53 = arith.subi %52, %arg12 : i32
      %c8_i32_26 = arith.constant 8 : i32
      %54 = arith.muli %53, %c8_i32_26 : i32
      %55 = tpu.assume_multiple %54, 8 : i32
      %56 = arith.index_cast %55 : i32 to index
      %c0_27 = arith.constant 0 : index
      %57 = vector.load %arg11[%56, %c0_27] : memref<80x512xf32, #tpu.memory_space<vmem>>, vector<8x512xf32>
      %c0_28 = arith.constant 0 : index
      %c0_29 = arith.constant 0 : index
      %58 = vector.load %arg7[%c0_28, %c0_29] : memref<128x512xf32, #tpu.memory_space<vmem>>, vector<128x512xf32>
      %cst_30 = arith.constant dense<0.000000e+00> : vector<8x512xf32>
      %59 = tpu.matmul %arg15, %58, %cst_30 {dimension_numbers = #tpu.dot_dimension_numbers<[1], [0], [0], [1], [0, 0, 1, 1], [], []>} : vector<8x128xf32>, vector<128x512xf32>, vector<8x512xf32> -> vector<8x512xf32>
      %60 = arith.addf %57, %59 : vector<8x512xf32>
      %61 = vector.extract_strided_slice %60 {offsets = [0, 0], sizes = [8, 384], strides = [1, 1]} : vector<8x512xf32> to vector<8x384xf32>
      %62 = arith.negf %61 : vector<8x384xf32>
      %63 = math.exp %62 : vector<8x384xf32>
      %cst_31 = arith.constant 1.000000e+00 : f32
      %64 = vector.broadcast %cst_31 : f32 to vector<8x384xf32>
      %65 = arith.addf %64, %63 : vector<8x384xf32>
      %66 = arith.divf %64, %65 : vector<8x384xf32>
      %67 = vector.extract_strided_slice %66 {offsets = [0, 0], sizes = [8, 128], strides = [1, 1]} : vector<8x384xf32> to vector<8x128xf32>
      %68 = vector.extract_strided_slice %66 {offsets = [0, 128], sizes = [8, 128], strides = [1, 1]} : vector<8x384xf32> to vector<8x128xf32>
      %69 = vector.extract_strided_slice %66 {offsets = [0, 256], sizes = [8, 128], strides = [1, 1]} : vector<8x384xf32> to vector<8x128xf32>
      %70 = vector.extract_strided_slice %60 {offsets = [0, 384], sizes = [8, 128], strides = [1, 1]} : vector<8x512xf32> to vector<8x128xf32>
      %71 = math.tanh %70 : vector<8x128xf32>
      %72 = arith.mulf %68, %arg16 : vector<8x128xf32>
      %73 = arith.mulf %67, %71 : vector<8x128xf32>
      %74 = arith.addf %72, %73 : vector<8x128xf32>
      %75 = math.tanh %74 : vector<8x128xf32>
      %76 = arith.mulf %69, %75 : vector<8x128xf32>
      %77 = vector.broadcast %53 : i32 to vector<8x1xi32>
      %78 = arith.cmpi slt, %77, %13 : vector<8x1xi32>
      %79 = vector.shape_cast %78 : vector<8x1xi1> to vector<8x1xi1>
      %80 = vector.broadcast %79 : vector<8x1xi1> to vector<8x128xi1>
      %81 = arith.select %80, %76, %arg15 : vector<8x128xi1>, vector<8x128xf32>
      %82 = vector.shape_cast %78 : vector<8x1xi1> to vector<8x1xi1>
      %83 = vector.broadcast %82 : vector<8x1xi1> to vector<8x128xi1>
      %84 = arith.select %83, %74, %arg16 : vector<8x128xi1>, vector<8x128xf32>
      %cst_32 = arith.constant 0.000000e+00 : f32
      %85 = vector.shape_cast %45 : vector<8x1xi1> to vector<8x1xi1>
      %86 = vector.broadcast %85 : vector<8x1xi1> to vector<8x128xi1>
      %87 = vector.broadcast %cst_32 : f32 to vector<8x128xf32>
      %88 = arith.select %86, %43, %87 : vector<8x128xi1>, vector<8x128xf32>
      %89 = arith.index_cast %arg12 : i32 to index
      %c0_33 = arith.constant 0 : index
      %c0_34 = arith.constant 0 : index
      %90 = vector.load %arg9[%89, %c0_33, %c0_34] : memref<10x8x256xf32, #tpu.memory_space<vmem>>, vector<1x8x128xf32>
      %91 = vector.shape_cast %90 : vector<1x8x128xf32> to vector<8x128xf32>
      %92 = vector.shape_cast %88 : vector<8x128xf32> to vector<1x8x128xf32>
      tpu.vector_store %arg9[%89, %c0_33, %c0_34], %92 {strides = array<i32>} : memref<10x8x256xf32, #tpu.memory_space<vmem>>, vector<1x8x128xf32>,
      %cst_35 = arith.constant 0.000000e+00 : f32
      %93 = vector.shape_cast %78 : vector<8x1xi1> to vector<8x1xi1>
      %94 = vector.broadcast %93 : vector<8x1xi1> to vector<8x128xi1>
      %95 = vector.broadcast %cst_35 : f32 to vector<8x128xf32>
      %96 = arith.select %94, %76, %95 : vector<8x128xi1>, vector<8x128xf32>
      %97 = arith.index_cast %53 : i32 to index
      %c0_36 = arith.constant 0 : index
      %c128 = arith.constant 128 : index
      %98 = vector.load %arg9[%97, %c0_36, %c128] : memref<10x8x256xf32, #tpu.memory_space<vmem>>, vector<1x8x128xf32>
      %99 = vector.shape_cast %98 : vector<1x8x128xf32> to vector<8x128xf32>
      %100 = vector.shape_cast %96 : vector<8x128xf32> to vector<1x8x128xf32>
      tpu.vector_store %arg9[%97, %c0_36, %c128], %100 {strides = array<i32>} : memref<10x8x256xf32, #tpu.memory_space<vmem>>, vector<1x8x128xf32>,
      scf.yield %48, %51, %81, %84 : vector<8x128xf32>, vector<8x128xf32>, vector<8x128xf32>, vector<8x128xf32>
    }
    %c0_i32_18 = arith.constant 0 : i32
    %c10_i32 = arith.constant 10 : i32
    %19 = arith.subi %c10_i32, %14 : i32
    %20 = arith.addi %14, %19 : i32
    %c1_i32_19 = arith.constant 1 : i32
    scf.for %arg12 = %14 to %20 step %c1_i32_19  : i32 {
      %cst_20 = arith.constant 0.000000e+00 : f32
      %21 = vector.broadcast %cst_20 : f32 to vector<8x256xf32>
      %22 = arith.index_cast %arg12 : i32 to index
      %c0_21 = arith.constant 0 : index
      %c0_22 = arith.constant 0 : index
      %23 = vector.load %arg9[%22, %c0_21, %c0_22] : memref<10x8x256xf32, #tpu.memory_space<vmem>>, vector<1x8x256xf32>
      %24 = vector.shape_cast %23 : vector<1x8x256xf32> to vector<8x256xf32>
      %25 = vector.shape_cast %21 : vector<8x256xf32> to vector<1x8x256xf32>
      tpu.vector_store %arg9[%22, %c0_21, %c0_22], %25 {strides = array<i32>} : memref<10x8x256xf32, #tpu.memory_space<vmem>>, vector<1x8x256xf32>,
    }
    return
  }
}

</mosaic_0001>

<llo_original>
// kernel: tpu_custom_call.1
$region0: #{tpu_custom_call.1}
  #allocation0 [shape = 'u32[]', space=smem, size = 0x4, offset = 0x4, fixed_abs, tag = 'smem constant byte address 0x4 - core index']
  #allocation1 [shape = 'u32[144,128]{1,0:T(1,128)}', space=vmem, size = 0x12000, scoped, tag = 'internal scratch']
  #allocation2 [shape = 'f32[80,512]{1,0:T(8,128)}', space=vmem, size = 0x28000, scoped, tag = 'scratch operand']
  #allocation3 [shape = 'f32[80,512]{1,0:T(8,128)}', space=vmem, size = 0x28000, scoped, tag = 'scratch operand']
  #allocation4 [shape = 's32[1]{0:T(128)S(6)}', space=smem, size = 0x200, scoped, tag = 'scoped memory for tpu_custom_call.1']
  %s0 = inlined_call_operand.<no memory space> [shape: s32[1], index: 0, kind: input, shape index: {}]
  %s1 = inlined_call_operand.vmem [shape: s32[8,1], index: 1, kind: input, shape index: {}]
  %s2 = inlined_call_operand.vmem [shape: f32[80,32], index: 2, kind: input, shape index: {}]
  %s3 = inlined_call_operand.vmem [shape: f32[32,512], index: 3, kind: input, shape index: {}]
  %s4 = inlined_call_operand.hbm [shape: f32[128,512], index: 4, kind: input, shape index: {}]
  %s5 = inlined_call_operand.vmem [shape: f32[1,512], index: 5, kind: input, shape index: {}]
  %s6 = inlined_call_operand.hbm [shape: f32[32,512], index: 6, kind: input, shape index: {}]
  %s7 = inlined_call_operand.hbm [shape: f32[128,512], index: 7, kind: input, shape index: {}]
  %s8 = inlined_call_operand.vmem [shape: f32[1,512], index: 8, kind: input, shape index: {}]
  %s9 = inlined_call_operand.hbm [shape: f32[10,8,256], index: 9, kind: output, shape index: {}]
  %s10 = sld [smem:[#allocation0]]
  $region72: #{tpu_custom_call.1} parent=0
    _
  %s12 = ssub.s32 1, %s10
  %s13 = scalar_select 0, %s12, %s10
  %14 = sst [smem:[#allocation4]] %s0
  $region1: #{tpu_custom_call.1} parent=0
    #allocation5 [shape = 'u8[262144]{0}', space=vmem, size = 0x40000, scoped, tag = 'input window, operand 4, single buffered']
    #allocation6 [shape = 's32[1]{0}', space=sflag, size = 0x4, scoped, tag = 'scoped memory for tpu_custom_call.1']
    #allocation7 [shape = 's32[1]{0}', space=sflag, size = 0x4, scoped, tag = 'scoped memory for tpu_custom_call.1']
    #allocation8 [shape = 'u8[65536]{0}', space=vmem, size = 0x10000, scoped, tag = 'input window, operand 6, single buffered']
    #allocation9 [shape = 's32[1]{0}', space=sflag, size = 0x4, scoped, tag = 'scoped memory for tpu_custom_call.1']
    #allocation10 [shape = 'u8[262144]{0}', space=vmem, size = 0x40000, scoped, tag = 'input window, operand 7, single buffered']
    #allocation11 [shape = 'u8[81920]{0}', space=vmem, size = 0x14000, scoped, tag = 'output window, operand 0, single buffered']
    %15 = vsyncpa [#allocation6], 0
    %16 = vsyncpa [#allocation9], 0
    %17 = vsyncpa [#allocation7], 0
    // Predicated region
    $region2: #{tpu_custom_call.1} parent=1 // pred_check
      _
    $region3: #{tpu_custom_call.1} parent=1 // pred_check_branch
      %19 = sbr.rel (0) target = $region5
    $region4: #{tpu_custom_call.1} parent=1 // pred_region
      _
    $region5: #{tpu_custom_call.1} parent=1 // pred_fallthru
      _
    // Predicated region
    $region6: #{tpu_custom_call.1} parent=1 // pred_check
      _
    $region7: #{tpu_custom_call.1} parent=1 // pred_check_branch
      %21 = sbr.rel (0) target = $region9
    $region8: #{tpu_custom_call.1} parent=1 // pred_region
      _
    $region9: #{tpu_custom_call.1} parent=1 // pred_fallthru
      _
    // Predicated region
    $region10: #{tpu_custom_call.1} parent=1 // pred_check
      _
    $region11: #{tpu_custom_call.1} parent=1 // pred_check_branch
      %23 = sbr.rel (0) target = $region13
    $region12: #{tpu_custom_call.1} parent=1 // pred_region
      _
    $region13: #{tpu_custom_call.1} parent=1 // pred_fallthru
      _
    // Predicated region
    $region14: #{tpu_custom_call.1} parent=1 // pred_check
      _
    $region15: #{tpu_custom_call.1} parent=1 // pred_check_branch
      %25 = sbr.rel (0) target = $region17
    $region16: #{tpu_custom_call.1} parent=1 // pred_region
      _
    $region17: #{tpu_custom_call.1} parent=1 // pred_fallthru
      _
    // Predicated region
    $region18: #{tpu_custom_call.1} parent=1 // pred_check
      _
    $region19: #{tpu_custom_call.1} parent=1 // pred_check_branch
      %27 = sbr.rel (0) target = $region21
    $region20: #{tpu_custom_call.1} parent=1 // pred_region
      %s29 = ssub.s32 8192, 8192
      %30 = vsyncadd [#allocation6], %s29
      %s31 = sshll.u32 [#allocation5], 4
      %s32 = int_to_ptr.vmem [resolvable:$true] %s31
      %37 = dma.hbm_to_vmem [thread:$0]  %s4, 8192, %s32, [#allocation6], 512, 512, 32
    $region21: #{tpu_custom_call.1} parent=1 // pred_fallthru
      _
    // Predicated region
    $region22: #{tpu_custom_call.1} parent=1 // pred_check
      _
    $region23: #{tpu_custom_call.1} parent=1 // pred_check_branch
      %39 = sbr.rel (0) target = $region25
    $region24: #{tpu_custom_call.1} parent=1 // pred_region
      _
    $region25: #{tpu_custom_call.1} parent=1 // pred_fallthru
      _
    // Predicated region
    $region26: #{tpu_custom_call.1} parent=1 // pred_check
      _
    $region27: #{tpu_custom_call.1} parent=1 // pred_check_branch
      %41 = sbr.rel (0) target = $region29
    $region28: #{tpu_custom_call.1} parent=1 // pred_region
      %s43 = ssub.s32 2048, 2048
      %44 = vsyncadd [#allocation9], %s43
      %s45 = sshll.u32 [#allocation8], 4
      %s46 = int_to_ptr.vmem [resolvable:$true] %s45
      %51 = dma.hbm_to_vmem [thread:$0]  %s6, 2048, %s46, [#allocation9], 512, 512, 32
    $region29: #{tpu_custom_call.1} parent=1 // pred_fallthru
      _
    // Predicated region
    $region30: #{tpu_custom_call.1} parent=1 // pred_check
      _
    $region31: #{tpu_custom_call.1} parent=1 // pred_check_branch
      %53 = sbr.rel (0) target = $region33
    $region32: #{tpu_custom_call.1} parent=1 // pred_region
      %s55 = ssub.s32 8192, 8192
      %56 = vsyncadd [#allocation9], %s55
      %s57 = sshll.u32 [#allocation10], 4
      %s58 = int_to_ptr.vmem [resolvable:$true] %s57
      %63 = dma.hbm_to_vmem [thread:$0]  %s7, 8192, %s58, [#allocation9], 512, 512, 32
    $region33: #{tpu_custom_call.1} parent=1 // pred_fallthru
      _
    // Predicated region
    $region34: #{tpu_custom_call.1} parent=1 // pred_check
      _
    $region35: #{tpu_custom_call.1} parent=1 // pred_check_branch
      %65 = sbr.rel (0) target = $region37
    $region36: #{tpu_custom_call.1} parent=1 // pred_region
      _
    $region37: #{tpu_custom_call.1} parent=1 // pred_fallthru
      _
    // Predicated region
    $region38: #{tpu_custom_call.1} parent=1 // pred_check
      _
    $region39: #{tpu_custom_call.1} parent=1 // pred_check_branch
      %67 = sbr.rel (0) target = $region41
    $region40: #{tpu_custom_call.1} parent=1 // pred_region
      %68 = dma.done [#allocation6], 8192
    $region41: #{tpu_custom_call.1} parent=1 // pred_fallthru
      _
    // Predicated region
    $region42: #{tpu_custom_call.1} parent=1 // pred_check
      _
    $region43: #{tpu_custom_call.1} parent=1 // pred_check_branch
      %70 = sbr.rel (0) target = $region45
    $region44: #{tpu_custom_call.1} parent=1 // pred_region
      %71 = dma.done [#allocation9], 2048
    $region45: #{tpu_custom_call.1} parent=1 // pred_fallthru
      _
    // Predicated region
    $region46: #{tpu_custom_call.1} parent=1 // pred_check
      _
    $region47: #{tpu_custom_call.1} parent=1 // pred_check_branch
      %73 = sbr.rel (0) target = $region49
    $region48: #{tpu_custom_call.1} parent=1 // pred_region
      %74 = dma.done [#allocation9], 8192
    $region49: #{tpu_custom_call.1} parent=1 // pred_fallthru
      _
    %v75 = vld [vmem:[%s2] sm:$0xff]
    %v76 = vld [vmem:[%s2 + $0x8] sm:$0xff]
    %v77 = vld [vmem:[%s2 + $0x10] sm:$0xff]
    %v78 = vld [vmem:[%s2 + $0x18] sm:$0xff]
    %v79 = vld [vmem:[%s2 + $0x20] sm:$0xff]
    %v80 = vld [vmem:[%s2 + $0x28] sm:$0xff]
    %v81 = vld [vmem:[%s2 + $0x30] sm:$0xff]
    %v82 = vld [vmem:[%s2 + $0x38] sm:$0xff]
    %v83 = vld [vmem:[%s2 + $0x40] sm:$0xff]
    %v84 = vld [vmem:[%s2 + $0x48] sm:$0xff]
    %v85 = vld [vmem:[%s3] sm:$0xff]
    %v86 = vld [vmem:[%s3 + $0x8] sm:$0xff]
    %v87 = vld [vmem:[%s3 + $0x10] sm:$0xff]
    %v88 = vld [vmem:[%s3 + $0x18] sm:$0xff]
    %v89 = vld [vmem:[%s3 + $0x20] sm:$0xff]
    %v90 = vld [vmem:[%s3 + $0x28] sm:$0xff]
    %v91 = vld [vmem:[%s3 + $0x30] sm:$0xff]
    %v92 = vld [vmem:[%s3 + $0x38] sm:$0xff]
    %v93 = vld [vmem:[%s3 + $0x40] sm:$0xff]
    %v94 = vld [vmem:[%s3 + $0x48] sm:$0xff]
    %v95 = vld [vmem:[%s3 + $0x50] sm:$0xff]
    %v96 = vld [vmem:[%s3 + $0x58] sm:$0xff]
    %v97 = vld [vmem:[%s3 + $0x60] sm:$0xff]
    %v98 = vld [vmem:[%s3 + $0x68] sm:$0xff]
    %v99 = vld [vmem:[%s3 + $0x70] sm:$0xff]
    %v100 = vld [vmem:[%s3 + $0x78] sm:$0xff]
    %v101 = vld [vmem:[%s5] sm:$0xf]
    %v103 = vlaneseq
    %v104 = vshrl.u32 %v103, 7
    %v105 = vsub.s32 0, %v104
    %v106 = vrot.slane %v101, %v105
    %v107 = vlaneseq
    %v108 = vshrl.u32 %v107, 7
    %v109 = vsub.s32 1, %v108
    %v110 = vrot.slane %v101, %v109
    %v111 = vlaneseq
    %v112 = vshrl.u32 %v111, 7
    %v113 = vsub.s32 2, %v112
    %v114 = vrot.slane %v101, %v113
    %v115 = vlaneseq
    %v116 = vshrl.u32 %v115, 7
    %v117 = vsub.s32 3, %v116
    %v118 = vrot.slane %v101, %v117
    %vm123 = vcmask 261120
    %v125 = vsel %vm123, %v75, 0
    %v128 = vsel %vm123, %v76, 0
    %v131 = vsel %vm123, %v77, 0
    %v134 = vsel %vm123, %v78, 0
    %v137 = vsel %vm123, %v79, 0
    %v140 = vsel %vm123, %v80, 0
    %v143 = vsel %vm123, %v81, 0
    %v146 = vsel %vm123, %v82, 0
    %v149 = vsel %vm123, %v83, 0
    %v152 = vsel %vm123, %v84, 0
    %154 = vmatprep.subr.mxu0 %v86
    %155 = vmatpush1.msra.mxu0 %v85
    %156 = vmatprep.subr.mxu0 %v90
    %157 = vmatpush1.msra.mxu0 %v89
    %158 = vmatprep.subr.mxu0 %v94
    %159 = vmatpush1.msra.mxu0 %v93
    %160 = vmatprep.subr.mxu0 %v98
    %161 = vmatpush1.msra.mxu0 %v97
    %162 = vmatprep.subr.mxu0 0.0
    %163 = vmatpush1.msra.mxu0 0.0
    %164 = vmatprep.subr.mxu0 0.0
    %165 = vmatpush1.msra.mxu0 0.0
    %166 = vmatprep.subr.mxu0 0.0
    %167 = vmatpush1.msra.mxu0 0.0
    %168 = vmatprep.subr.mxu0 0.0
    %169 = vmatpush1.msra.mxu0 0.0
    %170 = vmatprep.subr.mxu0 0.0
    %171 = vmatpush1.msra.mxu0 0.0
    %172 = vmatprep.subr.mxu0 0.0
    %173 = vmatpush1.msra.mxu0 0.0
    %174 = vmatprep.subr.mxu0 0.0
    %175 = vmatpush1.msra.mxu0 0.0
    %176 = vmatprep.subr.mxu0 0.0
    %177 = vmatpush1.msra.mxu0 0.0
    %178 = vmatprep.subr.mxu0 0.0
    %179 = vmatpush1.msra.mxu0 0.0
    %180 = vmatprep.subr.mxu0 0.0
    %181 = vmatpush1.msra.mxu0 0.0
    %182 = vmatprep.subr.mxu0 0.0
    %183 = vmatpush1.msra.mxu0 0.0
    %184 = vmatprep.subr.mxu0 0.0
    %185 = vmatpush1.msra.mxu0 0.0
    %186 = vmatprep.subr.mxu0 0.0
    %187 = vmatpush1.msra.mxu0 0.0
    %188 = vmatprep.subr.mxu0 0.0
    %189 = vmatpush1.msra.mxu0 0.0
    %190 = vmatprep.subr.mxu0 0.0
    %191 = vmatpush1.msra.mxu0 0.0
    %192 = vmatprep.subr.mxu0 0.0
    %193 = vmatpush1.msra.mxu0 0.0
    %194 = vmatprep.subr.mxu0 0.0
    %195 = vmatpush1.msra.mxu0 0.0
    %196 = vmatprep.subr.mxu0 0.0
    %197 = vmatpush1.msra.mxu0 0.0
    %198 = vmatprep.subr.mxu0 0.0
    %199 = vmatpush1.msra.mxu0 0.0
    %200 = vmatprep.subr.mxu0 0.0
    %201 = vmatpush1.msra.mxu0 0.0
    %202 = vmatprep.subr.mxu0 0.0
    %203 = vmatpush1.msra.mxu0 0.0
    %204 = vmatprep.subr.mxu0 0.0
    %205 = vmatpush1.msra.mxu0 0.0
    %206 = vmatprep.subr.mxu0 0.0
    %207 = vmatpush1.msra.mxu0 0.0
    %208 = vmatprep.subr.mxu0 0.0
    %209 = vmatpush1.msra.mxu0 0.0
    %210 = vmatprep.subr.mxu0 0.0
    %211 = vmatpush1.msra.mxu0 0.0
    %212 = vmatprep.subr.mxu0 0.0
    %213 = vmatpush1.msra.mxu0 0.0
    %214 = vmatprep.subr.mxu0 0.0
    %215 = vmatpush1.msra.mxu0 0.0
    %216 = vmatprep.subr.mxu0 0.0
    %217 = vmatpush1.msra.mxu0 0.0
    %218 = vmatprep.mubr.f32.mxu0 0.0
    %219 = vmatmul.mubr.f32.gmra.mrb[0].mxu0 %v125
    %v220 = vpop.f32.mrb[0].mxu0
    %v221 = vadd.f32 %v106, %v220
    %v222 = vpop.f32.mrb[0].mxu0
    %v223 = vadd.f32 %v110, %v222
    %224 = vmatprep.mubr.f32.mxu0 0.0
    %225 = vmatmul.mubr.f32.gmra.mrb[0].mxu0 %v128
    %v226 = vpop.f32.mrb[0].mxu0
    %v227 = vadd.f32 %v106, %v226
    %v228 = vpop.f32.mrb[0].mxu0
    %v229 = vadd.f32 %v110, %v228
    %230 = vmatprep.mubr.f32.mxu0 0.0
    %231 = vmatmul.mubr.f32.gmra.mrb[0].mxu0 %v131
    %v232 = vpop.f32.mrb[0].mxu0
    %v233 = vadd.f32 %v106, %v232
    %v234 = vpop.f32.mrb[0].mxu0
    %v235 = vadd.f32 %v110, %v234
    %236 = vmatprep.mubr.f32.mxu0 0.0
    %237 = vmatmul.mubr.f32.gmra.mrb[0].mxu0 %v134
    %v238 = vpop.f32.mrb[0].mxu0
    %v239 = vadd.f32 %v106, %v238
    %v240 = vpop.f32.mrb[0].mxu0
    %v241 = vadd.f32 %v110, %v240
    %242 = vmatprep.mubr.f32.mxu0 0.0
    %243 = vmatmul.mubr.f32.gmra.mrb[0].mxu0 %v137
    %v244 = vpop.f32.mrb[0].mxu0
    %v245 = vadd.f32 %v106, %v244
    %v246 = vpop.f32.mrb[0].mxu0
    %v247 = vadd.f32 %v110, %v246
    %248 = vmatprep.mubr.f32.mxu0 0.0
    %249 = vmatmul.mubr.f32.gmra.mrb[0].mxu0 %v140
    %v250 = vpop.f32.mrb[0].mxu0
    %v251 = vadd.f32 %v106, %v250
    %v252 = vpop.f32.mrb[0].mxu0
    %v253 = vadd.f32 %v110, %v252
    %254 = vmatprep.mubr.f32.mxu0 0.0
    %255 = vmatmul.mubr.f32.gmra.mrb[0].mxu0 %v143
    %v256 = vpop.f32.mrb[0].mxu0
    %v257 = vadd.f32 %v106, %v256
    %v258 = vpop.f32.mrb[0].mxu0
    %v259 = vadd.f32 %v110, %v258
    %260 = vmatprep.mubr.f32.mxu0 0.0
    %261 = vmatmul.mubr.f32.gmra.mrb[0].mxu0 %v146
    %v262 = vpop.f32.mrb[0].mxu0
    %v263 = vadd.f32 %v106, %v262
    %v264 = vpop.f32.mrb[0].mxu0
    %v265 = vadd.f32 %v110, %v264
    %266 = vmatprep.mubr.f32.mxu0 0.0
    %267 = vmatmul.mubr.f32.gmra.mrb[0].mxu0 %v149
    %v268 = vpop.f32.mrb[0].mxu0
    %v269 = vadd.f32 %v106, %v268
    %v270 = vpop.f32.mrb[0].mxu0
    %v271 = vadd.f32 %v110, %v270
    %272 = vmatprep.mubr.f32.mxu0 0.0
    %273 = vmatmul.mubr.f32.gmra.mrb[0].mxu0 %v152
    %v274 = vpop.f32.mrb[0].mxu0
    %v275 = vadd.f32 %v106, %v274
    %v276 = vpop.f32.mrb[0].mxu0
    %v277 = vadd.f32 %v110, %v276
    %278 = vdwg.mxu0
    %279 = vmatprep.subr.mxu0 %v88
    %280 = vmatpush1.msra.mxu0 %v87
    %281 = vmatprep.subr.mxu0 %v92
    %282 = vmatpush1.msra.mxu0 %v91
    %283 = vmatprep.subr.mxu0 %v96
    %284 = vmatpush1.msra.mxu0 %v95
    %285 = vmatprep.subr.mxu0 %v100
    %286 = vmatpush1.msra.mxu0 %v99
    %287 = vmatprep.subr.mxu0 0.0
    %288 = vmatpush1.msra.mxu0 0.0
    %289 = vmatprep.subr.mxu0 0.0
    %290 = vmatpush1.msra.mxu0 0.0
    %291 = vmatprep.subr.mxu0 0.0
    %292 = vmatpush1.msra.mxu0 0.0
    %293 = vmatprep.subr.mxu0 0.0
    %294 = vmatpush1.msra.mxu0 0.0
    %295 = vmatprep.subr.mxu0 0.0
    %296 = vmatpush1.msra.mxu0 0.0
    %297 = vmatprep.subr.mxu0 0.0
    %298 = vmatpush1.msra.mxu0 0.0
    %299 = vmatprep.subr.mxu0 0.0
    %300 = vmatpush1.msra.mxu0 0.0
    %301 = vmatprep.subr.mxu0 0.0
    %302 = vmatpush1.msra.mxu0 0.0
    %303 = vmatprep.subr.mxu0 0.0
    %304 = vmatpush1.msra.mxu0 0.0
    %305 = vmatprep.subr.mxu0 0.0
    %306 = vmatpush1.msra.mxu0 0.0
    %307 = vmatprep.subr.mxu0 0.0
    %308 = vmatpush1.msra.mxu0 0.0
    %309 = vmatprep.subr.mxu0 0.0
    %310 = vmatpush1.msra.mxu0 0.0
    %311 = vmatprep.subr.mxu0 0.0
    %312 = vmatpush1.msra.mxu0 0.0
    %313 = vmatprep.subr.mxu0 0.0
    %314 = vmatpush1.msra.mxu0 0.0
    %315 = vmatprep.subr.mxu0 0.0
    %316 = vmatpush1.msra.mxu0 0.0
    %317 = vmatprep.subr.mxu0 0.0
    %318 = vmatpush1.msra.mxu0 0.0
    %319 = vmatprep.subr.mxu0 0.0
    %320 = vmatpush1.msra.mxu0 0.0
    %321 = vmatprep.subr.mxu0 0.0
    %322 = vmatpush1.msra.mxu0 0.0
    %323 = vmatprep.subr.mxu0 0.0
    %324 = vmatpush1.msra.mxu0 0.0
    %325 = vmatprep.subr.mxu0 0.0
    %326 = vmatpush1.msra.mxu0 0.0
    %327 = vmatprep.subr.mxu0 0.0
    %328 = vmatpush1.msra.mxu0 0.0
    %329 = vmatprep.subr.mxu0 0.0
    %330 = vmatpush1.msra.mxu0 0.0
    %331 = vmatprep.subr.mxu0 0.0
    %332 = vmatpush1.msra.mxu0 0.0
    %333 = vmatprep.subr.mxu0 0.0
    %334 = vmatpush1.msra.mxu0 0.0
    %335 = vmatprep.subr.mxu0 0.0
    %336 = vmatpush1.msra.mxu0 0.0
    %337 = vmatprep.subr.mxu0 0.0
    %338 = vmatpush1.msra.mxu0 0.0
    %339 = vmatprep.subr.mxu0 0.0
    %340 = vmatpush1.msra.mxu0 0.0
    %341 = vmatprep.subr.mxu0 0.0
    %342 = vmatpush1.msra.mxu0 0.0
    %343 = vmatprep.mubr.f32.mxu0 0.0
    %344 = vmatmul.mubr.f32.gmra.mrb[0].mxu0 %v125
    %v345 = vpop.f32.mrb[0].mxu0
    %v346 = vadd.f32 %v114, %v345
    %v347 = vpop.f32.mrb[0].mxu0
    %v348 = vadd.f32 %v118, %v347
    %349 = vmatprep.mubr.f32.mxu0 0.0
    %350 = vmatmul.mubr.f32.gmra.mrb[0].mxu0 %v128
    %v351 = vpop.f32.mrb[0].mxu0
    %v352 = vadd.f32 %v114, %v351
    %v353 = vpop.f32.mrb[0].mxu0
    %v354 = vadd.f32 %v118, %v353
    %355 = vmatprep.mubr.f32.mxu0 0.0
    %356 = vmatmul.mubr.f32.gmra.mrb[0].mxu0 %v131
    %v357 = vpop.f32.mrb[0].mxu0
    %v358 = vadd.f32 %v114, %v357
    %v359 = vpop.f32.mrb[0].mxu0
    %v360 = vadd.f32 %v118, %v359
    %361 = vmatprep.mubr.f32.mxu0 0.0
    %362 = vmatmul.mubr.f32.gmra.mrb[0].mxu0 %v134
    %v363 = vpop.f32.mrb[0].mxu0
    %v364 = vadd.f32 %v114, %v363
    %v365 = vpop.f32.mrb[0].mxu0
    %v366 = vadd.f32 %v118, %v365
    %367 = vmatprep.mubr.f32.mxu0 0.0
    %368 = vmatmul.mubr.f32.gmra.mrb[0].mxu0 %v137
    %v369 = vpop.f32.mrb[0].mxu0
    %v370 = vadd.f32 %v114, %v369
    %v371 = vpop.f32.mrb[0].mxu0
    %v372 = vadd.f32 %v118, %v371
    %373 = vmatprep.mubr.f32.mxu0 0.0
    %374 = vmatmul.mubr.f32.gmra.mrb[0].mxu0 %v140
    %v375 = vpop.f32.mrb[0].mxu0
    %v376 = vadd.f32 %v114, %v375
    %v377 = vpop.f32.mrb[0].mxu0
    %v378 = vadd.f32 %v118, %v377
    %379 = vmatprep.mubr.f32.mxu0 0.0
    %380 = vmatmul.mubr.f32.gmra.mrb[0].mxu0 %v143
    %v381 = vpop.f32.mrb[0].mxu0
    %v382 = vadd.f32 %v114, %v381
    %v383 = vpop.f32.mrb[0].mxu0
    %v384 = vadd.f32 %v118, %v383
    %385 = vmatprep.mubr.f32.mxu0 0.0
    %386 = vmatmul.mubr.f32.gmra.mrb[0].mxu0 %v146
    %v387 = vpop.f32.mrb[0].mxu0
    %v388 = vadd.f32 %v114, %v387
    %v389 = vpop.f32.mrb[0].mxu0
    %v390 = vadd.f32 %v118, %v389
    %391 = vmatprep.mubr.f32.mxu0 0.0
    %392 = vmatmul.mubr.f32.gmra.mrb[0].mxu0 %v149
    %v393 = vpop.f32.mrb[0].mxu0
    %v394 = vadd.f32 %v114, %v393
    %v395 = vpop.f32.mrb[0].mxu0
    %v396 = vadd.f32 %v118, %v395
    %397 = vmatprep.mubr.f32.mxu0 0.0
    %398 = vmatmul.mubr.f32.gmra.mrb[0].mxu0 %v152
    %v399 = vpop.f32.mrb[0].mxu0
    %v400 = vadd.f32 %v114, %v399
    %v401 = vpop.f32.mrb[0].mxu0
    %v402 = vadd.f32 %v118, %v401
    %403 = vdwg.mxu0
    %404 = vst [vmem:[#allocation2] sm:$0xff] %v221
    %405 = vst [vmem:[#allocation2 + $0x8] sm:$0xff] %v223
    %406 = vst [vmem:[#allocation2 + $0x10] sm:$0xff] %v346
    %407 = vst [vmem:[#allocation2 + $0x18] sm:$0xff] %v348
    %408 = vst [vmem:[#allocation2 + $0x20] sm:$0xff] %v227
    %409 = vst [vmem:[#allocation2 + $0x28] sm:$0xff] %v229
    %410 = vst [vmem:[#allocation2 + $0x30] sm:$0xff] %v352
    %411 = vst [vmem:[#allocation2 + $0x38] sm:$0xff] %v354
    %412 = vst [vmem:[#allocation2 + $0x40] sm:$0xff] %v233
    %413 = vst [vmem:[#allocation2 + $0x48] sm:$0xff] %v235
    %414 = vst [vmem:[#allocation2 + $0x50] sm:$0xff] %v358
    %415 = vst [vmem:[#allocation2 + $0x58] sm:$0xff] %v360
    %416 = vst [vmem:[#allocation2 + $0x60] sm:$0xff] %v239
    %417 = vst [vmem:[#allocation2 + $0x68] sm:$0xff] %v241
    %418 = vst [vmem:[#allocation2 + $0x70] sm:$0xff] %v364
    %419 = vst [vmem:[#allocation2 + $0x78] sm:$0xff] %v366
    %420 = vst [vmem:[#allocation2 + $0x80] sm:$0xff] %v245
    %421 = vst [vmem:[#allocation2 + $0x88] sm:$0xff] %v247
    %422 = vst [vmem:[#allocation2 + $0x90] sm:$0xff] %v370
    %423 = vst [vmem:[#allocation2 + $0x98] sm:$0xff] %v372
    %424 = vst [vmem:[#allocation2 + $0xa0] sm:$0xff] %v251
    %425 = vst [vmem:[#allocation2 + $0xa8] sm:$0xff] %v253
    %426 = vst [vmem:[#allocation2 + $0xb0] sm:$0xff] %v376
    %427 = vst [vmem:[#allocation2 + $0xb8] sm:$0xff] %v378
    %428 = vst [vmem:[#allocation2 + $0xc0] sm:$0xff] %v257
    %429 = vst [vmem:[#allocation2 + $0xc8] sm:$0xff] %v259
    %430 = vst [vmem:[#allocation2 + $0xd0] sm:$0xff] %v382
    %431 = vst [vmem:[#allocation2 + $0xd8] sm:$0xff] %v384
    %432 = vst [vmem:[#allocation2 + $0xe0] sm:$0xff] %v263
    %433 = vst [vmem:[#allocation2 + $0xe8] sm:$0xff] %v265
    %434 = vst [vmem:[#allocation2 + $0xf0] sm:$0xff] %v388
    %435 = vst [vmem:[#allocation2 + $0xf8] sm:$0xff] %v390
    %436 = vst [vmem:[#allocation2 + $0x100] sm:$0xff] %v269
    %437 = vst [vmem:[#allocation2 + $0x108] sm:$0xff] %v271
    %438 = vst [vmem:[#allocation2 + $0x110] sm:$0xff] %v394
    %439 = vst [vmem:[#allocation2 + $0x118] sm:$0xff] %v396
    %440 = vst [vmem:[#allocation2 + $0x120] sm:$0xff] %v275
    %441 = vst [vmem:[#allocation2 + $0x128] sm:$0xff] %v277
    %442 = vst [vmem:[#allocation2 + $0x130] sm:$0xff] %v400
    %443 = vst [vmem:[#allocation2 + $0x138] sm:$0xff] %v402
    %v444 = vld [vmem:[#allocation8] sm:$0xff]
    %v445 = vld [vmem:[#allocation8 + $0x8] sm:$0xff]
    %v446 = vld [vmem:[#allocation8 + $0x10] sm:$0xff]
    %v447 = vld [vmem:[#allocation8 + $0x18] sm:$0xff]
    %v448 = vld [vmem:[#allocation8 + $0x20] sm:$0xff]
    %v449 = vld [vmem:[#allocation8 + $0x28] sm:$0xff]
    %v450 = vld [vmem:[#allocation8 + $0x30] sm:$0xff]
    %v451 = vld [vmem:[#allocation8 + $0x38] sm:$0xff]
    %v452 = vld [vmem:[#allocation8 + $0x40] sm:$0xff]
    %v453 = vld [vmem:[#allocation8 + $0x48] sm:$0xff]
    %v454 = vld [vmem:[#allocation8 + $0x50] sm:$0xff]
    %v455 = vld [vmem:[#allocation8 + $0x58] sm:$0xff]
    %v456 = vld [vmem:[#allocation8 + $0x60] sm:$0xff]
    %v457 = vld [vmem:[#allocation8 + $0x68] sm:$0xff]
    %v458 = vld [vmem:[#allocation8 + $0x70] sm:$0xff]
    %v459 = vld [vmem:[#allocation8 + $0x78] sm:$0xff]
    %v460 = vld [vmem:[%s8] sm:$0xf]
    %v462 = vlaneseq
    %v463 = vshrl.u32 %v462, 7
    %v464 = vsub.s32 0, %v463
    %v465 = vrot.slane %v460, %v464
    %v466 = vlaneseq
    %v467 = vshrl.u32 %v466, 7
    %v468 = vsub.s32 1, %v467
    %v469 = vrot.slane %v460, %v468
    %v470 = vlaneseq
    %v471 = vshrl.u32 %v470, 7
    %v472 = vsub.s32 2, %v471
    %v473 = vrot.slane %v460, %v472
    %v474 = vlaneseq
    %v475 = vshrl.u32 %v474, 7
    %v476 = vsub.s32 3, %v475
    %v477 = vrot.slane %v460, %v476
    %482 = vmatprep.subr.mxu0 %v445
    %483 = vmatpush1.msra.mxu0 %v444
    %484 = vmatprep.subr.mxu0 %v449
    %485 = vmatpush1.msra.mxu0 %v448
    %486 = vmatprep.subr.mxu0 %v453
    %487 = vmatpush1.msra.mxu0 %v452
    %488 = vmatprep.subr.mxu0 %v457
    %489 = vmatpush1.msra.mxu0 %v456
    %490 = vmatprep.subr.mxu0 0.0
    %491 = vmatpush1.msra.mxu0 0.0
    %492 = vmatprep.subr.mxu0 0.0
    %493 = vmatpush1.msra.mxu0 0.0
    %494 = vmatprep.subr.mxu0 0.0
    %495 = vmatpush1.msra.mxu0 0.0
    %496 = vmatprep.subr.mxu0 0.0
    %497 = vmatpush1.msra.mxu0 0.0
    %498 = vmatprep.subr.mxu0 0.0
    %499 = vmatpush1.msra.mxu0 0.0
    %500 = vmatprep.subr.mxu0 0.0
    %501 = vmatpush1.msra.mxu0 0.0
    %502 = vmatprep.subr.mxu0 0.0
    %503 = vmatpush1.msra.mxu0 0.0
    %504 = vmatprep.subr.mxu0 0.0
    %505 = vmatpush1.msra.mxu0 0.0
    %506 = vmatprep.subr.mxu0 0.0
    %507 = vmatpush1.msra.mxu0 0.0
    %508 = vmatprep.subr.mxu0 0.0
    %509 = vmatpush1.msra.mxu0 0.0
    %510 = vmatprep.subr.mxu0 0.0
    %511 = vmatpush1.msra.mxu0 0.0
    %512 = vmatprep.subr.mxu0 0.0
    %513 = vmatpush1.msra.mxu0 0.0
    %514 = vmatprep.subr.mxu0 0.0
    %515 = vmatpush1.msra.mxu0 0.0
    %516 = vmatprep.subr.mxu0 0.0
    %517 = vmatpush1.msra.mxu0 0.0
    %518 = vmatprep.subr.mxu0 0.0
    %519 = vmatpush1.msra.mxu0 0.0
    %520 = vmatprep.subr.mxu0 0.0
    %521 = vmatpush1.msra.mxu0 0.0
    %522 = vmatprep.subr.mxu0 0.0
    %523 = vmatpush1.msra.mxu0 0.0
    %524 = vmatprep.subr.mxu0 0.0
    %525 = vmatpush1.msra.mxu0 0.0
    %526 = vmatprep.subr.mxu0 0.0
    %527 = vmatpush1.msra.mxu0 0.0
    %528 = vmatprep.subr.mxu0 0.0
    %529 = vmatpush1.msra.mxu0 0.0
    %530 = vmatprep.subr.mxu0 0.0
    %531 = vmatpush1.msra.mxu0 0.0
    %532 = vmatprep.subr.mxu0 0.0
    %533 = vmatpush1.msra.mxu0 0.0
    %534 = vmatprep.subr.mxu0 0.0
    %535 = vmatpush1.msra.mxu0 0.0
    %536 = vmatprep.subr.mxu0 0.0
    %537 = vmatpush1.msra.mxu0 0.0
    %538 = vmatprep.subr.mxu0 0.0
    %539 = vmatpush1.msra.mxu0 0.0
    %540 = vmatprep.subr.mxu0 0.0
    %541 = vmatpush1.msra.mxu0 0.0
    %542 = vmatprep.subr.mxu0 0.0
    %543 = vmatpush1.msra.mxu0 0.0
    %544 = vmatprep.subr.mxu0 0.0
    %545 = vmatpush1.msra.mxu0 0.0
    %546 = vmatprep.mubr.f32.mxu0 0.0
    %547 = vmatmul.mubr.f32.gmra.mrb[0].mxu0 %v125
    %v548 = vpop.f32.mrb[0].mxu0
    %v549 = vadd.f32 %v465, %v548
    %v550 = vpop.f32.mrb[0].mxu0
    %v551 = vadd.f32 %v469, %v550
    %552 = vmatprep.mubr.f32.mxu0 0.0
    %553 = vmatmul.mubr.f32.gmra.mrb[0].mxu0 %v128
    %v554 = vpop.f32.mrb[0].mxu0
    %v555 = vadd.f32 %v465, %v554
    %v556 = vpop.f32.mrb[0].mxu0
    %v557 = vadd.f32 %v469, %v556
    %558 = vmatprep.mubr.f32.mxu0 0.0
    %559 = vmatmul.mubr.f32.gmra.mrb[0].mxu0 %v131
    %v560 = vpop.f32.mrb[0].mxu0
    %v561 = vadd.f32 %v465, %v560
    %v562 = vpop.f32.mrb[0].mxu0
    %v563 = vadd.f32 %v469, %v562
    %564 = vmatprep.mubr.f32.mxu0 0.0
    %565 = vmatmul.mubr.f32.gmra.mrb[0].mxu0 %v134
    %v566 = vpop.f32.mrb[0].mxu0
    %v567 = vadd.f32 %v465, %v566
    %v568 = vpop.f32.mrb[0].mxu0
    %v569 = vadd.f32 %v469, %v568
    %570 = vmatprep.mubr.f32.mxu0 0.0
    %571 = vmatmul.mubr.f32.gmra.mrb[0].mxu0 %v137
    %v572 = vpop.f32.mrb[0].mxu0
    %v573 = vadd.f32 %v465, %v572
    %v574 = vpop.f32.mrb[0].mxu0
    %v575 = vadd.f32 %v469, %v574
    %576 = vmatprep.mubr.f32.mxu0 0.0
    %577 = vmatmul.mubr.f32.gmra.mrb[0].mxu0 %v140
    %v578 = vpop.f32.mrb[0].mxu0
    %v579 = vadd.f32 %v465, %v578
    %v580 = vpop.f32.mrb[0].mxu0
    %v581 = vadd.f32 %v469, %v580
    %582 = vmatprep.mubr.f32.mxu0 0.0
    %583 = vmatmul.mubr.f32.gmra.mrb[0].mxu0 %v143
    %v584 = vpop.f32.mrb[0].mxu0
    %v585 = vadd.f32 %v465, %v584
    %v586 = vpop.f32.mrb[0].mxu0
    %v587 = vadd.f32 %v469, %v586
    %588 = vmatprep.mubr.f32.mxu0 0.0
    %589 = vmatmul.mubr.f32.gmra.mrb[0].mxu0 %v146
    %v590 = vpop.f32.mrb[0].mxu0
    %v591 = vadd.f32 %v465, %v590
    %v592 = vpop.f32.mrb[0].mxu0
    %v593 = vadd.f32 %v469, %v592
    %594 = vmatprep.mubr.f32.mxu0 0.0
    %595 = vmatmul.mubr.f32.gmra.mrb[0].mxu0 %v149
    %v596 = vpop.f32.mrb[0].mxu0
    %v597 = vadd.f32 %v465, %v596
    %v598 = vpop.f32.mrb[0].mxu0
    %v599 = vadd.f32 %v469, %v598
    %600 = vmatprep.mubr.f32.mxu0 0.0
    %601 = vmatmul.mubr.f32.gmra.mrb[0].mxu0 %v152
    %v602 = vpop.f32.mrb[0].mxu0
    %v603 = vadd.f32 %v465, %v602
    %v604 = vpop.f32.mrb[0].mxu0
    %v605 = vadd.f32 %v469, %v604
    %606 = vdwg.mxu0
    %607 = vmatprep.subr.mxu0 %v447
    %608 = vmatpush1.msra.mxu0 %v446
    %609 = vmatprep.subr.mxu0 %v451
    %610 = vmatpush1.msra.mxu0 %v450
    %611 = vmatprep.subr.mxu0 %v455
    %612 = vmatpush1.msra.mxu0 %v454
    %613 = vmatprep.subr.mxu0 %v459
    %614 = vmatpush1.msra.mxu0 %v458
    %615 = vmatprep.subr.mxu0 0.0
    %616 = vmatpush1.msra.mxu0 0.0
    %617 = vmatprep.subr.mxu0 0.0
    %618 = vmatpush1.msra.mxu0 0.0
    %619 = vmatprep.subr.mxu0 0.0
    %620 = vmatpush1.msra.mxu0 0.0
    %621 = vmatprep.subr.mxu0 0.0
    %622 = vmatpush1.msra.mxu0 0.0
    %623 = vmatprep.subr.mxu0 0.0
    %624 = vmatpush1.msra.mxu0 0.0
    %625 = vmatprep.subr.mxu0 0.0
    %626 = vmatpush1.msra.mxu0 0.0
    %627 = vmatprep.subr.mxu0 0.0
    %628 = vmatpush1.msra.mxu0 0.0
    %629 = vmatprep.subr.mxu0 0.0
    %630 = vmatpush1.msra.mxu0 0.0
    %631 = vmatprep.subr.mxu0 0.0
    %632 = vmatpush1.msra.mxu0 0.0
    %633 = vmatprep.subr.mxu0 0.0
    %634 = vmatpush1.msra.mxu0 0.0
    %635 = vmatprep.subr.mxu0 0.0
    %636 = vmatpush1.msra.mxu0 0.0
    %637 = vmatprep.subr.mxu0 0.0
    %638 = vmatpush1.msra.mxu0 0.0
    %639 = vmatprep.subr.mxu0 0.0
    %640 = vmatpush1.msra.mxu0 0.0
    %641 = vmatprep.subr.mxu0 0.0
    %642 = vmatpush1.msra.mxu0 0.0
    %643 = vmatprep.subr.mxu0 0.0
    %644 = vmatpush1.msra.mxu0 0.0
    %645 = vmatprep.subr.mxu0 0.0
    %646 = vmatpush1.msra.mxu0 0.0
    %647 = vmatprep.subr.mxu0 0.0
    %648 = vmatpush1.msra.mxu0 0.0
    %649 = vmatprep.subr.mxu0 0.0
    %650 = vmatpush1.msra.mxu0 0.0
    %651 = vmatprep.subr.mxu0 0.0
    %652 = vmatpush1.msra.mxu0 0.0
    %653 = vmatprep.subr.mxu0 0.0
    %654 = vmatpush1.msra.mxu0 0.0
    %655 = vmatprep.subr.mxu0 0.0
    %656 = vmatpush1.msra.mxu0 0.0
    %657 = vmatprep.subr.mxu0 0.0
    %658 = vmatpush1.msra.mxu0 0.0
    %659 = vmatprep.subr.mxu0 0.0
    %660 = vmatpush1.msra.mxu0 0.0
    %661 = vmatprep.subr.mxu0 0.0
    %662 = vmatpush1.msra.mxu0 0.0
    %663 = vmatprep.subr.mxu0 0.0
    %664 = vmatpush1.msra.mxu0 0.0
    %665 = vmatprep.subr.mxu0 0.0
    %666 = vmatpush1.msra.mxu0 0.0
    %667 = vmatprep.subr.mxu0 0.0
    %668 = vmatpush1.msra.mxu0 0.0
    %669 = vmatprep.subr.mxu0 0.0
    %670 = vmatpush1.msra.mxu0 0.0
    %671 = vmatprep.mubr.f32.mxu0 0.0
    %672 = vmatmul.mubr.f32.gmra.mrb[0].mxu0 %v125
    %v673 = vpop.f32.mrb[0].mxu0
    %v674 = vadd.f32 %v473, %v673
    %v675 = vpop.f32.mrb[0].mxu0
    %v676 = vadd.f32 %v477, %v675
    %677 = vmatprep.mubr.f32.mxu0 0.0
    %678 = vmatmul.mubr.f32.gmra.mrb[0].mxu0 %v128
    %v679 = vpop.f32.mrb[0].mxu0
    %v680 = vadd.f32 %v473, %v679
    %v681 = vpop.f32.mrb[0].mxu0
    %v682 = vadd.f32 %v477, %v681
    %683 = vmatprep.mubr.f32.mxu0 0.0
    %684 = vmatmul.mubr.f32.gmra.mrb[0].mxu0 %v131
    %v685 = vpop.f32.mrb[0].mxu0
    %v686 = vadd.f32 %v473, %v685
    %v687 = vpop.f32.mrb[0].mxu0
    %v688 = vadd.f32 %v477, %v687
    %689 = vmatprep.mubr.f32.mxu0 0.0
    %690 = vmatmul.mubr.f32.gmra.mrb[0].mxu0 %v134
    %v691 = vpop.f32.mrb[0].mxu0
    %v692 = vadd.f32 %v473, %v691
    %v693 = vpop.f32.mrb[0].mxu0
    %v694 = vadd.f32 %v477, %v693
    %695 = vmatprep.mubr.f32.mxu0 0.0
    %696 = vmatmul.mubr.f32.gmra.mrb[0].mxu0 %v137
    %v697 = vpop.f32.mrb[0].mxu0
    %v698 = vadd.f32 %v473, %v697
    %v699 = vpop.f32.mrb[0].mxu0
    %v700 = vadd.f32 %v477, %v699
    %701 = vmatprep.mubr.f32.mxu0 0.0
    %702 = vmatmul.mubr.f32.gmra.mrb[0].mxu0 %v140
    %v703 = vpop.f32.mrb[0].mxu0
    %v704 = vadd.f32 %v473, %v703
    %v705 = vpop.f32.mrb[0].mxu0
    %v706 = vadd.f32 %v477, %v705
    %707 = vmatprep.mubr.f32.mxu0 0.0
    %708 = vmatmul.mubr.f32.gmra.mrb[0].mxu0 %v143
    %v709 = vpop.f32.mrb[0].mxu0
    %v710 = vadd.f32 %v473, %v709
    %v711 = vpop.f32.mrb[0].mxu0
    %v712 = vadd.f32 %v477, %v711
    %713 = vmatprep.mubr.f32.mxu0 0.0
    %714 = vmatmul.mubr.f32.gmra.mrb[0].mxu0 %v146
    %v715 = vpop.f32.mrb[0].mxu0
    %v716 = vadd.f32 %v473, %v715
    %v717 = vpop.f32.mrb[0].mxu0
    %v718 = vadd.f32 %v477, %v717
    %719 = vmatprep.mubr.f32.mxu0 0.0
    %720 = vmatmul.mubr.f32.gmra.mrb[0].mxu0 %v149
    %v721 = vpop.f32.mrb[0].mxu0
    %v722 = vadd.f32 %v473, %v721
    %v723 = vpop.f32.mrb[0].mxu0
    %v724 = vadd.f32 %v477, %v723
    %725 = vmatprep.mubr.f32.mxu0 0.0
    %726 = vmatmul.mubr.f32.gmra.mrb[0].mxu0 %v152
    %v727 = vpop.f32.mrb[0].mxu0
    %v728 = vadd.f32 %v473, %v727
    %v729 = vpop.f32.mrb[0].mxu0
    %v730 = vadd.f32 %v477, %v729
    %731 = vdwg.mxu0
    %732 = vst [vmem:[#allocation3] sm:$0xff] %v549
    %733 = vst [vmem:[#allocation3 + $0x8] sm:$0xff] %v551
    %734 = vst [vmem:[#allocation3 + $0x10] sm:$0xff] %v674
    %735 = vst [vmem:[#allocation3 + $0x18] sm:$0xff] %v676
    %736 = vst [vmem:[#allocation3 + $0x20] sm:$0xff] %v555
    %737 = vst [vmem:[#allocation3 + $0x28] sm:$0xff] %v557
    %738 = vst [vmem:[#allocation3 + $0x30] sm:$0xff] %v680
    %739 = vst [vmem:[#allocation3 + $0x38] sm:$0xff] %v682
    %740 = vst [vmem:[#allocation3 + $0x40] sm:$0xff] %v561
    %741 = vst [vmem:[#allocation3 + $0x48] sm:$0xff] %v563
    %742 = vst [vmem:[#allocation3 + $0x50] sm:$0xff] %v686
    %743 = vst [vmem:[#allocation3 + $0x58] sm:$0xff] %v688
    %744 = vst [vmem:[#allocation3 + $0x60] sm:$0xff] %v567
    %745 = vst [vmem:[#allocation3 + $0x68] sm:$0xff] %v569
    %746 = vst [vmem:[#allocation3 + $0x70] sm:$0xff] %v692
    %747 = vst [vmem:[#allocation3 + $0x78] sm:$0xff] %v694
    %748 = vst [vmem:[#allocation3 + $0x80] sm:$0xff] %v573
    %749 = vst [vmem:[#allocation3 + $0x88] sm:$0xff] %v575
    %750 = vst [vmem:[#allocation3 + $0x90] sm:$0xff] %v698
    %751 = vst [vmem:[#allocation3 + $0x98] sm:$0xff] %v700
    %752 = vst [vmem:[#allocation3 + $0xa0] sm:$0xff] %v579
    %753 = vst [vmem:[#allocation3 + $0xa8] sm:$0xff] %v581
    %754 = vst [vmem:[#allocation3 + $0xb0] sm:$0xff] %v704
    %755 = vst [vmem:[#allocation3 + $0xb8] sm:$0xff] %v706
    %756 = vst [vmem:[#allocation3 + $0xc0] sm:$0xff] %v585
    %757 = vst [vmem:[#allocation3 + $0xc8] sm:$0xff] %v587
    %758 = vst [vmem:[#allocation3 + $0xd0] sm:$0xff] %v710
    %759 = vst [vmem:[#allocation3 + $0xd8] sm:$0xff] %v712
    %760 = vst [vmem:[#allocation3 + $0xe0] sm:$0xff] %v591
    %761 = vst [vmem:[#allocation3 + $0xe8] sm:$0xff] %v593
    %762 = vst [vmem:[#allocation3 + $0xf0] sm:$0xff] %v716
    %763 = vst [vmem:[#allocation3 + $0xf8] sm:$0xff] %v718
    %764 = vst [vmem:[#allocation3 + $0x100] sm:$0xff] %v597
    %765 = vst [vmem:[#allocation3 + $0x108] sm:$0xff] %v599
    %766 = vst [vmem:[#allocation3 + $0x110] sm:$0xff] %v722
    %767 = vst [vmem:[#allocation3 + $0x118] sm:$0xff] %v724
    %768 = vst [vmem:[#allocation3 + $0x120] sm:$0xff] %v603
    %769 = vst [vmem:[#allocation3 + $0x128] sm:$0xff] %v605
    %770 = vst [vmem:[#allocation3 + $0x130] sm:$0xff] %v728
    %771 = vst [vmem:[#allocation3 + $0x138] sm:$0xff] %v730
    %v772 = vld [vmem:[%s1] sm:$0xff]
    %s773 = sld [smem:[#allocation4]]
    // While loop
    $region50: #{tpu_custom_call.1} parent=1 // loop_pre_header
      _
    $region51: #{tpu_custom_call.1} parent=1 // loop_header
      %s775 = sphi 0, %s777
      %p776 = scmp.ge.s32.totalorder %s775, %s773
      %v780 = vphi 0.0, %v1035
      %v781 = vphi 0.0, %v1036
      %v782 = vphi 0.0, %v1290
      %v783 = vphi 0.0, %v1291
    $region52: #{tpu_custom_call.1} parent=1 // loop_header_branch
      %779 = sbr.rel (%p776) target = $region56
    $region53: #{tpu_custom_call.1} parent=1 // loop_body
      %s784 = smul.u32 %s775, 8
      %s785 = sshra.s32 %s784, 3
      %s786 = sand.u32 %s784, 7
      %s787 = smul.u32 %s785, 4
      %s788 = smul.addr %s787, 8
      %s789 = scalar_lea.vmem [#allocation2], %s788
      %v790 = vld [vmem:[%s789] sm:$0xff]
      %v791 = vld [vmem:[%s789 + $0x8] sm:$0xff]
      %v792 = vld [vmem:[%s789 + $0x10] sm:$0xff]
      %v793 = vld [vmem:[%s789 + $0x18] sm:$0xff]
      %v794 = vld [vmem:[#allocation5] sm:$0xff]
      %v795 = vld [vmem:[#allocation5 + $0x8] sm:$0xff]
      %v796 = vld [vmem:[#allocation5 + $0x10] sm:$0xff]
      %v797 = vld [vmem:[#allocation5 + $0x18] sm:$0xff]
      %v798 = vld [vmem:[#allocation5 + $0x20] sm:$0xff]
      %v799 = vld [vmem:[#allocation5 + $0x28] sm:$0xff]
      %v800 = vld [vmem:[#allocation5 + $0x30] sm:$0xff]
      %v801 = vld [vmem:[#allocation5 + $0x38] sm:$0xff]
      %v802 = vld [vmem:[#allocation5 + $0x40] sm:$0xff]
      %v803 = vld [vmem:[#allocation5 + $0x48] sm:$0xff]
      %v804 = vld [vmem:[#allocation5 + $0x50] sm:$0xff]
      %v805 = vld [vmem:[#allocation5 + $0x58] sm:$0xff]
      %v806 = vld [vmem:[#allocation5 + $0x60] sm:$0xff]
      %v807 = vld [vmem:[#allocation5 + $0x68] sm:$0xff]
      %v808 = vld [vmem:[#allocation5 + $0x70] sm:$0xff]
      %v809 = vld [vmem:[#allocation5 + $0x78] sm:$0xff]
      %v810 = vld [vmem:[#allocation5 + $0x80] sm:$0xff]
      %v811 = vld [vmem:[#allocation5 + $0x88] sm:$0xff]
      %v812 = vld [vmem:[#allocation5 + $0x90] sm:$0xff]
      %v813 = vld [vmem:[#allocation5 + $0x98] sm:$0xff]
      %v814 = vld [vmem:[#allocation5 + $0xa0] sm:$0xff]
      %v815 = vld [vmem:[#allocation5 + $0xa8] sm:$0xff]
      %v816 = vld [vmem:[#allocation5 + $0xb0] sm:$0xff]
      %v817 = vld [vmem:[#allocation5 + $0xb8] sm:$0xff]
      %v818 = vld [vmem:[#allocation5 + $0xc0] sm:$0xff]
      %v819 = vld [vmem:[#allocation5 + $0xc8] sm:$0xff]
      %v820 = vld [vmem:[#allocation5 + $0xd0] sm:$0xff]
      %v821 = vld [vmem:[#allocation5 + $0xd8] sm:$0xff]
      %v822 = vld [vmem:[#allocation5 + $0xe0] sm:$0xff]
      %v823 = vld [vmem:[#allocation5 + $0xe8] sm:$0xff]
      %v824 = vld [vmem:[#allocation5 + $0xf0] sm:$0xff]
      %v825 = vld [vmem:[#allocation5 + $0xf8] sm:$0xff]
      %v826 = vld [vmem:[#allocation5 + $0x100] sm:$0xff]
      %v827 = vld [vmem:[#allocation5 + $0x108] sm:$0xff]
      %v828 = vld [vmem:[#allocation5 + $0x110] sm:$0xff]
      %v829 = vld [vmem:[#allocation5 + $0x118] sm:$0xff]
      %v830 = vld [vmem:[#allocation5 + $0x120] sm:$0xff]
      %v831 = vld [vmem:[#allocation5 + $0x128] sm:$0xff]
      %v832 = vld [vmem:[#allocation5 + $0x130] sm:$0xff]
      %v833 = vld [vmem:[#allocation5 + $0x138] sm:$0xff]
      %v834 = vld [vmem:[#allocation5 + $0x140] sm:$0xff]
      %v835 = vld [vmem:[#allocation5 + $0x148] sm:$0xff]
      %v836 = vld [vmem:[#allocation5 + $0x150] sm:$0xff]
      %v837 = vld [vmem:[#allocation5 + $0x158] sm:$0xff]
      %v838 = vld [vmem:[#allocation5 + $0x160] sm:$0xff]
      %v839 = vld [vmem:[#allocation5 + $0x168] sm:$0xff]
      %v840 = vld [vmem:[#allocation5 + $0x170] sm:$0xff]
      %v841 = vld [vmem:[#allocation5 + $0x178] sm:$0xff]
      %v842 = vld [vmem:[#allocation5 + $0x180] sm:$0xff]
      %v843 = vld [vmem:[#allocation5 + $0x188] sm:$0xff]
      %v844 = vld [vmem:[#allocation5 + $0x190] sm:$0xff]
      %v845 = vld [vmem:[#allocation5 + $0x198] sm:$0xff]
      %v846 = vld [vmem:[#allocation5 + $0x1a0] sm:$0xff]
      %v847 = vld [vmem:[#allocation5 + $0x1a8] sm:$0xff]
      %v848 = vld [vmem:[#allocation5 + $0x1b0] sm:$0xff]
      %v849 = vld [vmem:[#allocation5 + $0x1b8] sm:$0xff]
      %v850 = vld [vmem:[#allocation5 + $0x1c0] sm:$0xff]
      %v851 = vld [vmem:[#allocation5 + $0x1c8] sm:$0xff]
      %v852 = vld [vmem:[#allocation5 + $0x1d0] sm:$0xff]
      %v853 = vld [vmem:[#allocation5 + $0x1d8] sm:$0xff]
      %v854 = vld [vmem:[#allocation5 + $0x1e0] sm:$0xff]
      %v855 = vld [vmem:[#allocation5 + $0x1e8] sm:$0xff]
      %v856 = vld [vmem:[#allocation5 + $0x1f0] sm:$0xff]
      %v857 = vld [vmem:[#allocation5 + $0x1f8] sm:$0xff]
      %858 = vmatprep.subr.mxu0 %v795
      %859 = vmatpush1.msra.mxu0 %v794
      %860 = vmatprep.subr.mxu0 %v799
      %861 = vmatpush1.msra.mxu0 %v798
      %862 = vmatprep.subr.mxu0 %v803
      %863 = vmatpush1.msra.mxu0 %v802
      %864 = vmatprep.subr.mxu0 %v807
      %865 = vmatpush1.msra.mxu0 %v806
      %866 = vmatprep.subr.mxu0 %v811
      %867 = vmatpush1.msra.mxu0 %v810
      %868 = vmatprep.subr.mxu0 %v815
      %869 = vmatpush1.msra.mxu0 %v814
      %870 = vmatprep.subr.mxu0 %v819
      %871 = vmatpush1.msra.mxu0 %v818
      %872 = vmatprep.subr.mxu0 %v823
      %873 = vmatpush1.msra.mxu0 %v822
      %874 = vmatprep.subr.mxu0 %v827
      %875 = vmatpush1.msra.mxu0 %v826
      %876 = vmatprep.subr.mxu0 %v831
      %877 = vmatpush1.msra.mxu0 %v830
      %878 = vmatprep.subr.mxu0 %v835
      %879 = vmatpush1.msra.mxu0 %v834
      %880 = vmatprep.subr.mxu0 %v839
      %881 = vmatpush1.msra.mxu0 %v838
      %882 = vmatprep.subr.mxu0 %v843
      %883 = vmatpush1.msra.mxu0 %v842
      %884 = vmatprep.subr.mxu0 %v847
      %885 = vmatpush1.msra.mxu0 %v846
      %886 = vmatprep.subr.mxu0 %v851
      %887 = vmatpush1.msra.mxu0 %v850
      %888 = vmatprep.subr.mxu0 %v855
      %889 = vmatpush1.msra.mxu0 %v854
      %890 = vmatprep.subr.mxu0 0.0
      %891 = vmatpush1.msra.mxu0 0.0
      %892 = vmatprep.subr.mxu0 0.0
      %893 = vmatpush1.msra.mxu0 0.0
      %894 = vmatprep.subr.mxu0 0.0
      %895 = vmatpush1.msra.mxu0 0.0
      %896 = vmatprep.subr.mxu0 0.0
      %897 = vmatpush1.msra.mxu0 0.0
      %898 = vmatprep.subr.mxu0 0.0
      %899 = vmatpush1.msra.mxu0 0.0
      %900 = vmatprep.subr.mxu0 0.0
      %901 = vmatpush1.msra.mxu0 0.0
      %902 = vmatprep.subr.mxu0 0.0
      %903 = vmatpush1.msra.mxu0 0.0
      %904 = vmatprep.subr.mxu0 0.0
      %905 = vmatpush1.msra.mxu0 0.0
      %906 = vmatprep.subr.mxu0 0.0
      %907 = vmatpush1.msra.mxu0 0.0
      %908 = vmatprep.subr.mxu0 0.0
      %909 = vmatpush1.msra.mxu0 0.0
      %910 = vmatprep.subr.mxu0 0.0
      %911 = vmatpush1.msra.mxu0 0.0
      %912 = vmatprep.subr.mxu0 0.0
      %913 = vmatpush1.msra.mxu0 0.0
      %914 = vmatprep.subr.mxu0 0.0
      %915 = vmatpush1.msra.mxu0 0.0
      %916 = vmatprep.subr.mxu0 0.0
      %917 = vmatpush1.msra.mxu0 0.0
      %918 = vmatprep.subr.mxu0 0.0
      %919 = vmatpush1.msra.mxu0 0.0
      %920 = vmatprep.subr.mxu0 0.0
      %921 = vmatpush1.msra.mxu0 0.0
      %922 = vmatprep.mubr.f32.mxu0 0.0
      %923 = vmatmul.mubr.f32.gmra.mrb[0].mxu0 %v780
      %v924 = vpop.f32.mrb[0].mxu0
      %v925 = vadd.f32 0.0, %v924
      %v926 = vpop.f32.mrb[0].mxu0
      %v927 = vadd.f32 0.0, %v926
      %928 = vdwg.mxu0
      %929 = vmatprep.subr.mxu0 %v797
      %930 = vmatpush1.msra.mxu0 %v796
      %931 = vmatprep.subr.mxu0 %v801
      %932 = vmatpush1.msra.mxu0 %v800
      %933 = vmatprep.subr.mxu0 %v805
      %934 = vmatpush1.msra.mxu0 %v804
      %935 = vmatprep.subr.mxu0 %v809
      %936 = vmatpush1.msra.mxu0 %v808
      %937 = vmatprep.subr.mxu0 %v813
      %938 = vmatpush1.msra.mxu0 %v812
      %939 = vmatprep.subr.mxu0 %v817
      %940 = vmatpush1.msra.mxu0 %v816
      %941 = vmatprep.subr.mxu0 %v821
      %942 = vmatpush1.msra.mxu0 %v820
      %943 = vmatprep.subr.mxu0 %v825
      %944 = vmatpush1.msra.mxu0 %v824
      %945 = vmatprep.subr.mxu0 %v829
      %946 = vmatpush1.msra.mxu0 %v828
      %947 = vmatprep.subr.mxu0 %v833
      %948 = vmatpush1.msra.mxu0 %v832
      %949 = vmatprep.subr.mxu0 %v837
      %950 = vmatpush1.msra.mxu0 %v836
      %951 = vmatprep.subr.mxu0 %v841
      %952 = vmatpush1.msra.mxu0 %v840
      %953 = vmatprep.subr.mxu0 %v845
      %954 = vmatpush1.msra.mxu0 %v844
      %955 = vmatprep.subr.mxu0 %v849
      %956 = vmatpush1.msra.mxu0 %v848
      %957 = vmatprep.subr.mxu0 %v853
      %958 = vmatpush1.msra.mxu0 %v852
      %959 = vmatprep.subr.mxu0 %v857
      %960 = vmatpush1.msra.mxu0 %v856
      %961 = vmatprep.subr.mxu0 0.0
      %962 = vmatpush1.msra.mxu0 0.0
      %963 = vmatprep.subr.mxu0 0.0
      %964 = vmatpush1.msra.mxu0 0.0
      %965 = vmatprep.subr.mxu0 0.0
      %966 = vmatpush1.msra.mxu0 0.0
      %967 = vmatprep.subr.mxu0 0.0
      %968 = vmatpush1.msra.mxu0 0.0
      %969 = vmatprep.subr.mxu0 0.0
      %970 = vmatpush1.msra.mxu0 0.0
      %971 = vmatprep.subr.mxu0 0.0
      %972 = vmatpush1.msra.mxu0 0.0
      %973 = vmatprep.subr.mxu0 0.0
      %974 = vmatpush1.msra.mxu0 0.0
      %975 = vmatprep.subr.mxu0 0.0
      %976 = vmatpush1.msra.mxu0 0.0
      %977 = vmatprep.subr.mxu0 0.0
      %978 = vmatpush1.msra.mxu0 0.0
      %979 = vmatprep.subr.mxu0 0.0
      %980 = vmatpush1.msra.mxu0 0.0
      %981 = vmatprep.subr.mxu0 0.0
      %982 = vmatpush1.msra.mxu0 0.0
      %983 = vmatprep.subr.mxu0 0.0
      %984 = vmatpush1.msra.mxu0 0.0
      %985 = vmatprep.subr.mxu0 0.0
      %986 = vmatpush1.msra.mxu0 0.0
      %987 = vmatprep.subr.mxu0 0.0
      %988 = vmatpush1.msra.mxu0 0.0
      %989 = vmatprep.subr.mxu0 0.0
      %990 = vmatpush1.msra.mxu0 0.0
      %991 = vmatprep.subr.mxu0 0.0
      %992 = vmatpush1.msra.mxu0 0.0
      %993 = vmatprep.mubr.f32.mxu0 0.0
      %994 = vmatmul.mubr.f32.gmra.mrb[0].mxu0 %v780
      %v995 = vpop.f32.mrb[0].mxu0
      %v996 = vadd.f32 0.0, %v995
      %v997 = vpop.f32.mrb[0].mxu0
      %v998 = vadd.f32 0.0, %v997
      %999 = vdwg.mxu0
      %v1000 = vadd.f32 %v790, %v925
      %v1001 = vadd.f32 %v791, %v927
      %v1002 = vadd.f32 %v792, %v996
      %v1003 = vadd.f32 %v793, %v998
      %v1004 = vxor.u32 %v1000, 2147483648
      %v1005 = vxor.u32 %v1001, 2147483648
      %v1006 = vxor.u32 %v1002, 2147483648
      %v1007 = vmul.f32 %v1004, 1.442695
      %v1008 = vpow.pop %v1007
      %v1009 = vmul.f32 %v1005, 1.442695
      %v1010 = vpow.pop %v1009
      %v1011 = vmul.f32 %v1006, 1.442695
      %v1012 = vpow.pop %v1011
      %v1013 = vadd.f32 %v1008, 1.0
      %v1014 = vadd.f32 %v1010, 1.0
      %v1015 = vadd.f32 %v1012, 1.0
      %v1016 = vrcp.pop %v1013
      %v1017 = vmul.f32 1.0, %v1016
      %v1018 = vrcp.pop %v1014
      %v1019 = vmul.f32 1.0, %v1018
      %v1020 = vrcp.pop %v1015
      %v1021 = vmul.f32 1.0, %v1020
      %v1022 = vtanh.pop %v1003
      %v1023 = vmul.f32 %v1019, %v781
      %v1024 = vmul.f32 %v1017, %v1022
      %v1025 = vadd.f32 %v1023, %v1024
      %v1026 = vtanh.pop %v1025
      %v1027 = vmul.f32 %v1021, %v1026
      %v1028 = vstv %s775
      %vm1029 = vcmp.lt.s32.totalorder %v1028, %v772
      %v1030 = vsel %vm1029, 1, 0
      %1031 = vset.pattern.permute.xlu0 0
      %1032 = vperm.xlu0 %1031, %v1030
      %v1033 = vpop.permute.xlu0 %1032
      %vm1034 = vcmp.eq.s32.totalorder %v1033, 1
      %v1035 = vsel %vm1034, %v1027, %v780
      %v1036 = vsel %vm1034, %v1025, %v781
      %s1037 = ssub.s32 %s773, 1
      %s1038 = ssub.s32 %s1037, %s775
      %s1039 = smul.u32 %s1038, 8
      %s1040 = sshra.s32 %s1039, 3
      %s1041 = sand.u32 %s1039, 7
      %s1042 = smul.u32 %s1040, 4
      %s1043 = smul.addr %s1042, 8
      %s1044 = scalar_lea.vmem [#allocation3], %s1043
      %v1045 = vld [vmem:[%s1044] sm:$0xff]
      %v1046 = vld [vmem:[%s1044 + $0x8] sm:$0xff]
      %v1047 = vld [vmem:[%s1044 + $0x10] sm:$0xff]
      %v1048 = vld [vmem:[%s1044 + $0x18] sm:$0xff]
      %v1049 = vld [vmem:[#allocation10] sm:$0xff]
      %v1050 = vld [vmem:[#allocation10 + $0x8] sm:$0xff]
      %v1051 = vld [vmem:[#allocation10 + $0x10] sm:$0xff]
      %v1052 = vld [vmem:[#allocation10 + $0x18] sm:$0xff]
      %v1053 = vld [vmem:[#allocation10 + $0x20] sm:$0xff]
      %v1054 = vld [vmem:[#allocation10 + $0x28] sm:$0xff]
      %v1055 = vld [vmem:[#allocation10 + $0x30] sm:$0xff]
      %v1056 = vld [vmem:[#allocation10 + $0x38] sm:$0xff]
      %v1057 = vld [vmem:[#allocation10 + $0x40] sm:$0xff]
      %v1058 = vld [vmem:[#allocation10 + $0x48] sm:$0xff]
      %v1059 = vld [vmem:[#allocation10 + $0x50] sm:$0xff]
      %v1060 = vld [vmem:[#allocation10 + $0x58] sm:$0xff]
      %v1061 = vld [vmem:[#allocation10 + $0x60] sm:$0xff]
      %v1062 = vld [vmem:[#allocation10 + $0x68] sm:$0xff]
      %v1063 = vld [vmem:[#allocation10 + $0x70] sm:$0xff]
      %v1064 = vld [vmem:[#allocation10 + $0x78] sm:$0xff]
      %v1065 = vld [vmem:[#allocation10 + $0x80] sm:$0xff]
      %v1066 = vld [vmem:[#allocation10 + $0x88] sm:$0xff]
      %v1067 = vld [vmem:[#allocation10 + $0x90] sm:$0xff]
      %v1068 = vld [vmem:[#allocation10 + $0x98] sm:$0xff]
      %v1069 = vld [vmem:[#allocation10 + $0xa0] sm:$0xff]
      %v1070 = vld [vmem:[#allocation10 + $0xa8] sm:$0xff]
      %v1071 = vld [vmem:[#allocation10 + $0xb0] sm:$0xff]
      %v1072 = vld [vmem:[#allocation10 + $0xb8] sm:$0xff]
      %v1073 = vld [vmem:[#allocation10 + $0xc0] sm:$0xff]
      %v1074 = vld [vmem:[#allocation10 + $0xc8] sm:$0xff]
      %v1075 = vld [vmem:[#allocation10 + $0xd0] sm:$0xff]
      %v1076 = vld [vmem:[#allocation10 + $0xd8] sm:$0xff]
      %v1077 = vld [vmem:[#allocation10 + $0xe0] sm:$0xff]
      %v1078 = vld [vmem:[#allocation10 + $0xe8] sm:$0xff]
      %v1079 = vld [vmem:[#allocation10 + $0xf0] sm:$0xff]
      %v1080 = vld [vmem:[#allocation10 + $0xf8] sm:$0xff]
      %v1081 = vld [vmem:[#allocation10 + $0x100] sm:$0xff]
      %v1082 = vld [vmem:[#allocation10 + $0x108] sm:$0xff]
      %v1083 = vld [vmem:[#allocation10 + $0x110] sm:$0xff]
      %v1084 = vld [vmem:[#allocation10 + $0x118] sm:$0xff]
      %v1085 = vld [vmem:[#allocation10 + $0x120] sm:$0xff]
      %v1086 = vld [vmem:[#allocation10 + $0x128] sm:$0xff]
      %v1087 = vld [vmem:[#allocation10 + $0x130] sm:$0xff]
      %v1088 = vld [vmem:[#allocation10 + $0x138] sm:$0xff]
      %v1089 = vld [vmem:[#allocation10 + $0x140] sm:$0xff]
      %v1090 = vld [vmem:[#allocation10 + $0x148] sm:$0xff]
      %v1091 = vld [vmem:[#allocation10 + $0x150] sm:$0xff]
      %v1092 = vld [vmem:[#allocation10 + $0x158] sm:$0xff]
      %v1093 = vld [vmem:[#allocation10 + $0x160] sm:$0xff]
      %v1094 = vld [vmem:[#allocation10 + $0x168] sm:$0xff]
      %v1095 = vld [vmem:[#allocation10 + $0x170] sm:$0xff]
      %v1096 = vld [vmem:[#allocation10 + $0x178] sm:$0xff]
      %v1097 = vld [vmem:[#allocation10 + $0x180] sm:$0xff]
      %v1098 = vld [vmem:[#allocation10 + $0x188] sm:$0xff]
      %v1099 = vld [vmem:[#allocation10 + $0x190] sm:$0xff]
      %v1100 = vld [vmem:[#allocation10 + $0x198] sm:$0xff]
      %v1101 = vld [vmem:[#allocation10 + $0x1a0] sm:$0xff]
      %v1102 = vld [vmem:[#allocation10 + $0x1a8] sm:$0xff]
      %v1103 = vld [vmem:[#allocation10 + $0x1b0] sm:$0xff]
      %v1104 = vld [vmem:[#allocation10 + $0x1b8] sm:$0xff]
      %v1105 = vld [vmem:[#allocation10 + $0x1c0] sm:$0xff]
      %v1106 = vld [vmem:[#allocation10 + $0x1c8] sm:$0xff]
      %v1107 = vld [vmem:[#allocation10 + $0x1d0] sm:$0xff]
      %v1108 = vld [vmem:[#allocation10 + $0x1d8] sm:$0xff]
      %v1109 = vld [vmem:[#allocation10 + $0x1e0] sm:$0xff]
      %v1110 = vld [vmem:[#allocation10 + $0x1e8] sm:$0xff]
      %v1111 = vld [vmem:[#allocation10 + $0x1f0] sm:$0xff]
      %v1112 = vld [vmem:[#allocation10 + $0x1f8] sm:$0xff]
      %1113 = vmatprep.subr.mxu0 %v1050
      %1114 = vmatpush1.msra.mxu0 %v1049
      %1115 = vmatprep.subr.mxu0 %v1054
      %1116 = vmatpush1.msra.mxu0 %v1053
      %1117 = vmatprep.subr.mxu0 %v1058
      %1118 = vmatpush1.msra.mxu0 %v1057
      %1119 = vmatprep.subr.mxu0 %v1062
      %1120 = vmatpush1.msra.mxu0 %v1061
      %1121 = vmatprep.subr.mxu0 %v1066
      %1122 = vmatpush1.msra.mxu0 %v1065
      %1123 = vmatprep.subr.mxu0 %v1070
      %1124 = vmatpush1.msra.mxu0 %v1069
      %1125 = vmatprep.subr.mxu0 %v1074
      %1126 = vmatpush1.msra.mxu0 %v1073
      %1127 = vmatprep.subr.mxu0 %v1078
      %1128 = vmatpush1.msra.mxu0 %v1077
      %1129 = vmatprep.subr.mxu0 %v1082
      %1130 = vmatpush1.msra.mxu0 %v1081
      %1131 = vmatprep.subr.mxu0 %v1086
      %1132 = vmatpush1.msra.mxu0 %v1085
      %1133 = vmatprep.subr.mxu0 %v1090
      %1134 = vmatpush1.msra.mxu0 %v1089
      %1135 = vmatprep.subr.mxu0 %v1094
      %1136 = vmatpush1.msra.mxu0 %v1093
      %1137 = vmatprep.subr.mxu0 %v1098
      %1138 = vmatpush1.msra.mxu0 %v1097
      %1139 = vmatprep.subr.mxu0 %v1102
      %1140 = vmatpush1.msra.mxu0 %v1101
      %1141 = vmatprep.subr.mxu0 %v1106
      %1142 = vmatpush1.msra.mxu0 %v1105
      %1143 = vmatprep.subr.mxu0 %v1110
      %1144 = vmatpush1.msra.mxu0 %v1109
      %1145 = vmatprep.subr.mxu0 0.0
      %1146 = vmatpush1.msra.mxu0 0.0
      %1147 = vmatprep.subr.mxu0 0.0
      %1148 = vmatpush1.msra.mxu0 0.0
      %1149 = vmatprep.subr.mxu0 0.0
      %1150 = vmatpush1.msra.mxu0 0.0
      %1151 = vmatprep.subr.mxu0 0.0
      %1152 = vmatpush1.msra.mxu0 0.0
      %1153 = vmatprep.subr.mxu0 0.0
      %1154 = vmatpush1.msra.mxu0 0.0
      %1155 = vmatprep.subr.mxu0 0.0
      %1156 = vmatpush1.msra.mxu0 0.0
      %1157 = vmatprep.subr.mxu0 0.0
      %1158 = vmatpush1.msra.mxu0 0.0
      %1159 = vmatprep.subr.mxu0 0.0
      %1160 = vmatpush1.msra.mxu0 0.0
      %1161 = vmatprep.subr.mxu0 0.0
      %1162 = vmatpush1.msra.mxu0 0.0
      %1163 = vmatprep.subr.mxu0 0.0
      %1164 = vmatpush1.msra.mxu0 0.0
      %1165 = vmatprep.subr.mxu0 0.0
      %1166 = vmatpush1.msra.mxu0 0.0
      %1167 = vmatprep.subr.mxu0 0.0
      %1168 = vmatpush1.msra.mxu0 0.0
      %1169 = vmatprep.subr.mxu0 0.0
      %1170 = vmatpush1.msra.mxu0 0.0
      %1171 = vmatprep.subr.mxu0 0.0
      %1172 = vmatpush1.msra.mxu0 0.0
      %1173 = vmatprep.subr.mxu0 0.0
      %1174 = vmatpush1.msra.mxu0 0.0
      %1175 = vmatprep.subr.mxu0 0.0
      %1176 = vmatpush1.msra.mxu0 0.0
      %1177 = vmatprep.mubr.f32.mxu0 0.0
      %1178 = vmatmul.mubr.f32.gmra.mrb[0].mxu0 %v782
      %v1179 = vpop.f32.mrb[0].mxu0
      %v1180 = vadd.f32 0.0, %v1179
      %v1181 = vpop.f32.mrb[0].mxu0
      %v1182 = vadd.f32 0.0, %v1181
      %1183 = vdwg.mxu0
      %1184 = vmatprep.subr.mxu0 %v1052
      %1185 = vmatpush1.msra.mxu0 %v1051
      %1186 = vmatprep.subr.mxu0 %v1056
      %1187 = vmatpush1.msra.mxu0 %v1055
      %1188 = vmatprep.subr.mxu0 %v1060
      %1189 = vmatpush1.msra.mxu0 %v1059
      %1190 = vmatprep.subr.mxu0 %v1064
      %1191 = vmatpush1.msra.mxu0 %v1063
      %1192 = vmatprep.subr.mxu0 %v1068
      %1193 = vmatpush1.msra.mxu0 %v1067
      %1194 = vmatprep.subr.mxu0 %v1072
      %1195 = vmatpush1.msra.mxu0 %v1071
      %1196 = vmatprep.subr.mxu0 %v1076
      %1197 = vmatpush1.msra.mxu0 %v1075
      %1198 = vmatprep.subr.mxu0 %v1080
      %1199 = vmatpush1.msra.mxu0 %v1079
      %1200 = vmatprep.subr.mxu0 %v1084
      %1201 = vmatpush1.msra.mxu0 %v1083
      %1202 = vmatprep.subr.mxu0 %v1088
      %1203 = vmatpush1.msra.mxu0 %v1087
      %1204 = vmatprep.subr.mxu0 %v1092
      %1205 = vmatpush1.msra.mxu0 %v1091
      %1206 = vmatprep.subr.mxu0 %v1096
      %1207 = vmatpush1.msra.mxu0 %v1095
      %1208 = vmatprep.subr.mxu0 %v1100
      %1209 = vmatpush1.msra.mxu0 %v1099
      %1210 = vmatprep.subr.mxu0 %v1104
      %1211 = vmatpush1.msra.mxu0 %v1103
      %1212 = vmatprep.subr.mxu0 %v1108
      %1213 = vmatpush1.msra.mxu0 %v1107
      %1214 = vmatprep.subr.mxu0 %v1112
      %1215 = vmatpush1.msra.mxu0 %v1111
      %1216 = vmatprep.subr.mxu0 0.0
      %1217 = vmatpush1.msra.mxu0 0.0
      %1218 = vmatprep.subr.mxu0 0.0
      %1219 = vmatpush1.msra.mxu0 0.0
      %1220 = vmatprep.subr.mxu0 0.0
      %1221 = vmatpush1.msra.mxu0 0.0
      %1222 = vmatprep.subr.mxu0 0.0
      %1223 = vmatpush1.msra.mxu0 0.0
      %1224 = vmatprep.subr.mxu0 0.0
      %1225 = vmatpush1.msra.mxu0 0.0
      %1226 = vmatprep.subr.mxu0 0.0
      %1227 = vmatpush1.msra.mxu0 0.0
      %1228 = vmatprep.subr.mxu0 0.0
      %1229 = vmatpush1.msra.mxu0 0.0
      %1230 = vmatprep.subr.mxu0 0.0
      %1231 = vmatpush1.msra.mxu0 0.0
      %1232 = vmatprep.subr.mxu0 0.0
      %1233 = vmatpush1.msra.mxu0 0.0
      %1234 = vmatprep.subr.mxu0 0.0
      %1235 = vmatpush1.msra.mxu0 0.0
      %1236 = vmatprep.subr.mxu0 0.0
      %1237 = vmatpush1.msra.mxu0 0.0
      %1238 = vmatprep.subr.mxu0 0.0
      %1239 = vmatpush1.msra.mxu0 0.0
      %1240 = vmatprep.subr.mxu0 0.0
      %1241 = vmatpush1.msra.mxu0 0.0
      %1242 = vmatprep.subr.mxu0 0.0
      %1243 = vmatpush1.msra.mxu0 0.0
      %1244 = vmatprep.subr.mxu0 0.0
      %1245 = vmatpush1.msra.mxu0 0.0
      %1246 = vmatprep.subr.mxu0 0.0
      %1247 = vmatpush1.msra.mxu0 0.0
      %1248 = vmatprep.mubr.f32.mxu0 0.0
      %1249 = vmatmul.mubr.f32.gmra.mrb[0].mxu0 %v782
      %v1250 = vpop.f32.mrb[0].mxu0
      %v1251 = vadd.f32 0.0, %v1250
      %v1252 = vpop.f32.mrb[0].mxu0
      %v1253 = vadd.f32 0.0, %v1252
      %1254 = vdwg.mxu0
      %v1255 = vadd.f32 %v1045, %v1180
      %v1256 = vadd.f32 %v1046, %v1182
      %v1257 = vadd.f32 %v1047, %v1251
      %v1258 = vadd.f32 %v1048, %v1253
      %v1259 = vxor.u32 %v1255, 2147483648
      %v1260 = vxor.u32 %v1256, 2147483648
      %v1261 = vxor.u32 %v1257, 2147483648
      %v1262 = vmul.f32 %v1259, 1.442695
      %v1263 = vpow.pop %v1262
      %v1264 = vmul.f32 %v1260, 1.442695
      %v1265 = vpow.pop %v1264
      %v1266 = vmul.f32 %v1261, 1.442695
      %v1267 = vpow.pop %v1266
      %v1268 = vadd.f32 %v1263, 1.0
      %v1269 = vadd.f32 %v1265, 1.0
      %v1270 = vadd.f32 %v1267, 1.0
      %v1271 = vrcp.pop %v1268
      %v1272 = vmul.f32 1.0, %v1271
      %v1273 = vrcp.pop %v1269
      %v1274 = vmul.f32 1.0, %v1273
      %v1275 = vrcp.pop %v1270
      %v1276 = vmul.f32 1.0, %v1275
      %v1277 = vtanh.pop %v1258
      %v1278 = vmul.f32 %v1274, %v783
      %v1279 = vmul.f32 %v1272, %v1277
      %v1280 = vadd.f32 %v1278, %v1279
      %v1281 = vtanh.pop %v1280
      %v1282 = vmul.f32 %v1276, %v1281
      %v1283 = vstv %s1038
      %vm1284 = vcmp.lt.s32.totalorder %v1283, %v772
      %v1285 = vsel %vm1284, 1, 0
      %1286 = vset.pattern.permute.xlu0 0
      %1287 = vperm.xlu0 %1286, %v1285
      %v1288 = vpop.permute.xlu0 %1287
      %vm1289 = vcmp.eq.s32.totalorder %v1288, 1
      %v1290 = vsel %vm1289, %v1282, %v782
      %v1291 = vsel %vm1289, %v1280, %v783
      %v1292 = vsel %vm1034, %v1027, 0.0
      %s1293 = smul.u32 %s775, 2
      %s1294 = smul.addr %s1293, 8
      %s1295 = scalar_lea.vmem [#allocation11], %s1294
      %1296 = vst [vmem:[%s1295] sm:$0xff] %v1292
      %v1297 = vsel %vm1289, %v1282, 0.0
      %s1298 = smul.u32 %s1038, 2
      %s1299 = smul.addr %s1298, 8
      %s1300 = scalar_lea.vmem [#allocation11], %s1299
      %1301 = vst [vmem:[%s1300 + $0x8] sm:$0xff] %v1297
    $region54: #{tpu_custom_call.1} parent=1 // loop_footer
      %s777 = sadd.s32 %s775, 1
    $region55: #{tpu_custom_call.1} parent=1 // loop_footer_branch
      %774 = sbr.rel target = $region51
    $region56: #{tpu_custom_call.1} parent=1 // loop_exit
      _
    // While loop
    $region57: #{tpu_custom_call.1} parent=1 // loop_pre_header
      _
    $region58: #{tpu_custom_call.1} parent=1 // loop_header
      %s1303 = sphi %s773, %s1305
      %p1304 = scmp.ge.s32.totalorder %s1303, 10
    $region59: #{tpu_custom_call.1} parent=1 // loop_header_branch
      %1307 = sbr.rel (%p1304) target = $region63
    $region60: #{tpu_custom_call.1} parent=1 // loop_body
      %s1308 = smul.u32 %s1303, 2
      %s1309 = smul.addr %s1308, 8
      %s1310 = scalar_lea.vmem [#allocation11], %s1309
      %1311 = vst [vmem:[%s1310] sm:$0xff] 0.0
      %1312 = vst [vmem:[%s1310 + $0x8] sm:$0xff] 0.0
    $region61: #{tpu_custom_call.1} parent=1 // loop_footer
      %s1305 = sadd.s32 %s1303, 1
    $region62: #{tpu_custom_call.1} parent=1 // loop_footer_branch
      %1302 = sbr.rel target = $region58
    $region63: #{tpu_custom_call.1} parent=1 // loop_exit
      _
    // Predicated region
    $region64: #{tpu_custom_call.1} parent=1 // pred_check
      _
    $region65: #{tpu_custom_call.1} parent=1 // pred_check_branch
      %1314 = sbr.rel (0) target = $region67
    $region66: #{tpu_custom_call.1} parent=1 // pred_region
      %s1316 = ssub.s32 2560, 2560
      %1317 = vsyncadd [#allocation7], %s1316
      %s1318 = sshll.u32 [#allocation11], 4
      %s1319 = int_to_ptr.vmem [resolvable:$true] %s1318
      %1324 = dma.vmem_to_hbm [thread:$0]  %s1319, 2560, %s9, [#allocation7], 256, 256, 16
    $region67: #{tpu_custom_call.1} parent=1 // pred_fallthru
      _
    // Predicated region
    $region68: #{tpu_custom_call.1} parent=1 // pred_check
      _
    $region69: #{tpu_custom_call.1} parent=1 // pred_check_branch
      %1326 = sbr.rel (0) target = $region71
    $region70: #{tpu_custom_call.1} parent=1 // pred_region
      %1327 = dma.done [#allocation7], 2560
    $region71: #{tpu_custom_call.1} parent=1 // pred_fallthru
      _
    %1328 = vsyncpa [#allocation6], 1
    %1329 = vsyncpa [#allocation9], 1
    %1330 = vsyncpa [#allocation7], 1

</llo_original>
